<compile_context>
chip_gen: v6e
topology: v6e:2x2x1
jax: 0.10.0
libtpu: 0.0.40
codegen_flags: <defaults>
</compile_context>

<pallas_src>
import jax
import jax.numpy as jnp
from jax import lax
from jax.experimental import pallas as pl
from jax.experimental.pallas import tpu as pltpu


def _vmem_capacity_bytes():
    """Physical VMEM of the attached TPU; conservative 64 MiB fallback (v7x)."""
    cap = 64 * 1024 * 1024
    try:
        info = pltpu.get_tpu_info()
        cap = int(getattr(info, "vmem_capacity_bytes", cap))
    except Exception:
        pass
    return cap


def _make_fp_kernel(num_layers: int, has_points1: bool, fuse_first: bool,
                    use_approx: bool):
    """Builds the Pallas kernel body (closure over static config)."""

    def _recip(x):
        if use_approx:
            return pl.reciprocal(x, approx=True)   # EUP slot, off the VALU
        return 1.0 / x

    def kernel(*refs):
        idx = 0
        xyz2_ref = refs[idx]; idx += 1           # (1, S, Ka)  bf16 hi/lo-augmented
        xyz1_ref = refs[idx]; idx += 1           # (1, Ka, TN) bf16 hi/lo-augmented
        if has_points1:
            p1_ref = refs[idx]; idx += 1         # (1, D1, TN) compute dtype
        if fuse_first:
            w0f_ref = refs[idx]; idx += 1        # (1, C0, S)  = W0_interp @ points2
        else:
            p2_ref = refs[idx]; idx += 1         # (1, D2, S)
            w0i_ref = refs[idx]; idx += 1        # (C0, D2)
        if has_points1:
            w0p_ref = refs[idx]; idx += 1        # (C0, D1)
        t0_ref = refs[idx]; idx += 1             # (C0, 1) f32
        rest = refs[idx:-1]                      # (Wl, tl) pairs for layers 1..L-1
        out_ref = refs[-1]                       # (1, Dout, TN)

        x2 = xyz2_ref[0]                         # [S, Ka]
        x1 = xyz1_ref[0]                         # [Ka, TN]

        # Pairwise squared distances on the MXU: the augmented hi/lo operands
        # already carry -2*cross, ||xyz||^2 and the ones terms, so this single
        # bf16 matmul (f32 accumulate, ~f32 accuracy via the hi/lo split) needs
        # zero [S, TN] VPU passes.
        d = jnp.dot(x2, x1, preferred_element_type=jnp.float32)      # [S, TN] f32

        # 3-NN inverse-distance weights, kept as ratios d0/dk in (0, 1]
        # (bf16-safe dynamic range; the d0 factor cancels after normalization,
        # so the normalized weights equal the reference's (1/dk)/sum(1/dj)).
        BIG = jnp.float32(1e30)
        mval0 = jnp.min(d, axis=0, keepdims=True)                    # [1, TN]
        mval0c = jnp.maximum(mval0, 1e-10)
        oh = d == mval0
        wacc = oh.astype(jnp.float32)                                # ratio_0 = 1
        dcur = jnp.where(oh, BIG, d)
        for k in range(1, 3):
            mval = jnp.min(dcur, axis=0, keepdims=True)
            ratio = mval0c * _recip(jnp.maximum(mval, 1e-10))        # [1, TN]
            oh = dcur == mval
            wacc = wacc + jnp.where(oh, ratio, 0.0)
            if k < 2:                                                # last iter: skip
                dcur = jnp.where(oh, BIG, dcur)
        # Normalizer = sum of what actually went into wacc (XLU reduce), so the
        # weights sum to exactly 1 even for exact-distance ties (>3 columns).
        wsum = jnp.sum(wacc, axis=0, keepdims=True)                  # [1, TN]
        inv_wsum = _recip(wsum)

        if fuse_first:
            # First MLP layer fused into the gather: (W0i @ P2) @ wacc, then
            # per-column normalization (commutes through the matmul).
            w0f = w0f_ref[0]                                         # [C0, S]
            h = jnp.dot(w0f, wacc.astype(w0f.dtype),
                        preferred_element_type=jnp.float32) * inv_wsum
        else:
            p2 = p2_ref[0]                                           # [D2, S]
            interp = jnp.dot(p2, wacc.astype(p2.dtype),
                             preferred_element_type=jnp.float32) * inv_wsum
            h = jnp.dot(w0i_ref[...], interp.astype(w0i_ref.dtype),
                        preferred_element_type=jnp.float32)
        if has_points1:
            # Channel concat([points1, interp]) replaced by a split first layer.
            h = h + jnp.dot(w0p_ref[...], p1_ref[0],
                            preferred_element_type=jnp.float32)
        h = jnp.maximum(h + t0_ref[...], 0.0)                        # [C0, TN]

        # Remaining pointwise MLP layers (channel-first, lane-dense in TN).
        for l in range(num_layers - 1):
            w = rest[2 * l]
            t = rest[2 * l + 1]
            h = jnp.maximum(
                jnp.dot(w[...], h.astype(w.dtype),
                        preferred_element_type=jnp.float32) + t[...], 0.0)

        out_ref[0] = h.astype(out_ref.dtype)

    return kernel


def pointnet_fp_forward(xyz1, xyz2, points1, points2, layer_params,
                        compute_dtype=jnp.bfloat16, out_dtype=None,
                        max_tile_n=1024, fuse_first=None):
    """Pallas forward.

    xyz1:[B,C,N]  xyz2:[B,C,S]  points1:[B,D1,N] or None  points2:[B,D2,S]
    layer_params: [(W:[Cin,Cout], scale:[1,Cout], shift:[1,Cout]), ...]
    Returns [B, D', N] (channel-first, matching the PyTorch module).
    """
    B, C, N = xyz1.shape
    S = xyz2.shape[2]
    D2 = points2.shape[1]
    has_p1 = points1 is not None
    D1 = points1.shape[1] if has_p1 else 0
    num_layers = len(layer_params)
    C0 = layer_params[0][0].shape[1]
    d_out = layer_params[-1][0].shape[1]
    if out_dtype is None:
        out_dtype = compute_dtype                    # halve writeback on bf16 path
    cbytes = jnp.dtype(compute_dtype).itemsize
    obytes = jnp.dtype(out_dtype).itemsize

    # Fuse conv0's interp half into the gather matmul when it lowers MXU work.
    if fuse_first is None:
        fuse_first = (C0 * S) <= (D2 * S + C0 * D2)

    # ---- Pad N to a multiple of 128 (lane-dense stores); slice at the end ----
    N_pad = pl.cdiv(N, 128) * 128
    pad = N_pad - N

    # ---- Augmented distance operands (cross term + norms on the MXU) --------
    #   d[s,n] = sum_c(-2*x2[s,c]*x1[c,n]) + ||x2[s]||^2 * 1 + 1 * ||x1[n]||^2
    xyz1_f = xyz1.astype(jnp.float32)
    if pad:
        xyz1_f = jnp.pad(xyz1_f, ((0, 0), (0, 0), (0, pad)))
    x1sq = jnp.sum(xyz1_f * xyz1_f, axis=1, keepdims=True)              # [B,1,Np]
    xyz1_aug = jnp.concatenate(
        [xyz1_f, jnp.ones((B, 1, N_pad), jnp.float32), x1sq], axis=1)   # [B,Ca,Np]

    xyz2_cl = jnp.transpose(xyz2, (0, 2, 1)).astype(jnp.float32)        # [B,S,C]
    x2sq = jnp.sum(xyz2_cl * xyz2_cl, axis=2, keepdims=True)            # [B,S,1]
    xyz2_aug = jnp.concatenate(
        [-2.0 * xyz2_cl, x2sq, jnp.ones((B, S, 1), jnp.float32)], axis=2)  # [B,S,Ca]
    Ca = C + 2

    # Manual bf16 hi/lo split (bf16x3): hi*hi + hi*lo + lo*hi folded into one
    # K = 3*Ca bf16 matmul with f32 accumulation -> ~f32-accurate distances on
    # the always-supported bf16 MXU path (neighbour ordering matches f32 ref).
    a1_hi = xyz1_aug.astype(jnp.bfloat16)
    a1_lo = (xyz1_aug - a1_hi.astype(jnp.float32)).astype(jnp.bfloat16)
    x1cat = jnp.concatenate([a1_hi, a1_lo, a1_hi], axis=1)              # [B,3Ca,Np]
    a2_hi = xyz2_aug.astype(jnp.bfloat16)
    a2_lo = (xyz2_aug - a2_hi.astype(jnp.float32)).astype(jnp.bfloat16)
    x2cat = jnp.concatenate([a2_hi, a2_hi, a2_lo], axis=2)              # [B,S,3Ca]
    Ka = 3 * Ca

    # ---- Generation-aware VMEM limit + budget-driven N tile ------------------
    vmem_cap = _vmem_capacity_bytes()
    vmem_limit = min((vmem_cap * 3) // 4, 96 * 1024 * 1024)  # ~48 MiB v7x, 96 MiB v5e/v6e
    max_ch = max([D2, C0] + [w.shape[1] for (w, _, _) in layer_params])
    res_ch = C0 if fuse_first else D2
    wt_bytes = sum(int(w.size) for (w, _, _) in layer_params) * cbytes

    def est_bytes(tn):
        nn_live = 6 * S * tn * 4                           # d/dcur/wacc/mask/temps (f32)
        io = 2 * Ka * tn * 2 + 2 * d_out * tn * obytes     # double-buffered xyz1cat / out
        if has_p1:
            io += 2 * D1 * tn * cbytes
        mlp_live = 3 * max_ch * tn * 4                     # h + layer temps (f32 acc)
        resident = 2 * S * Ka * 2 + res_ch * S * cbytes    # xyz2cat + (w0f | points2)
        return nn_live + io + mlp_live + resident + wt_bytes

    budget = int(0.85 * vmem_limit)
    min_tiles = 2 if B == 1 else 1          # keep >=2 programs for v7x's 2nd TensorCore
    tile_n = 128
    t = 128
    while t <= min(N_pad, max_tile_n):
        if N_pad % t == 0 and est_bytes(t) <= budget and N_pad // t >= min_tiles:
            tile_n = t
        t += 128
    if est_bytes(tile_n) > budget:          # pathological (huge S): raise the limit
        vmem_limit = min(int(0.95 * vmem_cap),
                         max(vmem_limit, int(1.2 * est_bytes(tile_n))))
    n_tiles = N_pad // tile_n

    # ---- Fold eval-mode BN scale into the conv weights, go channel-first -----
    #   W_cf[Cout, Cin] = (W * scale)^T,  t_cf[Cout, 1] = shift^T
    w_list = []
    for (w, s, sh) in layer_params:
        w_list.append((jnp.transpose(w * s), jnp.transpose(sh).astype(jnp.float32)))

    inputs, in_specs = [], []

    def add(arr, spec):
        inputs.append(arr)
        in_specs.append(spec)

    add(x2cat, pl.BlockSpec((1, S, Ka), lambda b, j: (b, 0, 0)))
    add(x1cat, pl.BlockSpec((1, Ka, tile_n), lambda b, j: (b, 0, j)))
    if has_p1:
        p1 = points1.astype(compute_dtype)
        if pad:
            p1 = jnp.pad(p1, ((0, 0), (0, 0), (0, pad)))
        add(p1, pl.BlockSpec((1, D1, tile_n), lambda b, j: (b, 0, j)))

    w0_cf, t0_cf = w_list[0]
    w0p = w0_cf[:, :D1] if has_p1 else None
    w0i = w0_cf[:, D1:] if has_p1 else w0_cf
    if fuse_first:
        w0f = jnp.einsum('od,bds->bos', w0i,
                         points2.astype(jnp.float32)).astype(compute_dtype)
        add(w0f, pl.BlockSpec((1, C0, S), lambda b, j: (b, 0, 0)))
    else:
        add(points2.astype(compute_dtype),
            pl.BlockSpec((1, D2, S), lambda b, j: (b, 0, 0)))
        add(w0i.astype(compute_dtype),
            pl.BlockSpec(w0i.shape, lambda b, j: (0, 0)))
    if has_p1:
        add(w0p.astype(compute_dtype),
            pl.BlockSpec(w0p.shape, lambda b, j: (0, 0)))
    add(t0_cf, pl.BlockSpec(t0_cf.shape, lambda b, j: (0, 0)))
    for (w_cf, t_cf) in w_list[1:]:
        add(w_cf.astype(compute_dtype), pl.BlockSpec(w_cf.shape, lambda b, j: (0, 0)))
        add(t_cf, pl.BlockSpec(t_cf.shape, lambda b, j: (0, 0)))

    use_approx = jnp.dtype(compute_dtype) != jnp.dtype(jnp.float32)
    kernel = _make_fp_kernel(num_layers, has_p1, fuse_first, use_approx)

    out = pl.pallas_call(
        kernel,
        out_shape=jax.ShapeDtypeStruct((B, d_out, N_pad), out_dtype),
        grid=(B, n_tiles),
        in_specs=in_specs,
        out_specs=pl.BlockSpec((1, d_out, tile_n), lambda b, j: (b, 0, j)),
        compiler_params=pltpu.CompilerParams(
            dimension_semantics=("parallel", "parallel"),
            vmem_limit_bytes=int(vmem_limit)),
    )(*inputs)
    return out[:, :, :N] if pad else out                               # [B, D', N]


def init_params(key, in_channel, mlp, eps=1e-5):
    """Deterministic params.  Returns [(W:[Cin,Cout], scale:[1,Cout], shift:[1,Cout])]."""
    params = []
    last = in_channel
    for out in mlp:
        key, k1, k2, k3, k4 = jax.random.split(key, 5)
        w = 0.1 * jax.random.normal(k1, (out, last), jnp.float32)   # conv weight [out,in]
        b = 0.1 * jax.random.normal(k2, (out,), jnp.float32)        # conv bias
        gamma = 1.0 + 0.1 * jax.random.normal(k3, (out,), jnp.float32)
        beta = 0.1 * jax.random.normal(k4, (out,), jnp.float32)
        mean = jnp.zeros((out,), jnp.float32)
        var = jnp.ones((out,), jnp.float32)
        scale = gamma / jnp.sqrt(var + eps)
        shift = (b - mean) * scale + beta
        params.append((w.T, scale.reshape(1, out), shift.reshape(1, out)))
        last = out
    return params


def ref_forward(xyz1, xyz2, points1, points2, layer_params):
    """Pure-JAX (f32) reference mirroring the PyTorch forward (eval-mode BN)."""
    x1 = jnp.transpose(xyz1, (0, 2, 1))      # [B, N, C]
    x2 = jnp.transpose(xyz2, (0, 2, 1))      # [B, S, C]
    p2 = jnp.transpose(points2, (0, 2, 1))   # [B, S, D2]
    d = (jnp.sum(x1 ** 2, -1)[:, :, None]
         + jnp.sum(x2 ** 2, -1)[:, None, :]
         - 2.0 * jnp.einsum('bnc,bsc->bns', x1, x2))
    neg_vals, idx = lax.top_k(-d, 3)                       # 3 smallest dists
    dists = jnp.maximum(-neg_vals, 1e-10)                  # [B, N, 3]
    w = 1.0 / dists
    w = w / jnp.sum(w, -1, keepdims=True)
    gathered = jax.vmap(lambda p, i: p[i])(p2, idx)        # [B, N, 3, D2]
    interp = jnp.sum(gathered * w[..., None], axis=2)      # [B, N, D2]
    if points1 is not None:
        p1 = jnp.transpose(points1, (0, 2, 1))
        feat = jnp.concatenate([p1, interp], axis=-1)
    else:
        feat = interp
    h = feat
    for (W, s, t) in layer_params:
        h = jnp.maximum(jnp.einsum('bni,io->bno', h, W) * s + t, 0.0)
    return jnp.transpose(h, (0, 2, 1))


def _check(out, ref, atol, rtol, min_frac=0.99, max_mean=None):
    """Fraction-close check (robust to rare near-tie 3-NN flips vs. top_k)."""
    out = jnp.asarray(out, jnp.float32)
    ref = jnp.asarray(ref, jnp.float32)
    err = jnp.abs(out - ref)
    tol = atol + rtol * jnp.abs(ref)
    frac_ok = float(jnp.mean((err <= tol).astype(jnp.float32)))
    mean_err = float(jnp.mean(err))
    assert frac_ok >= min_frac, (frac_ok, float(jnp.max(err)))
    if max_mean is not None:
        assert mean_err <= max_mean, mean_err


if __name__ == "__main__":
    # N is NOT a multiple of 128 -> exercises the padding path; S=64, small MLP.
    B, C, N, S = 2, 3, 500, 64
    D1, D2 = 16, 32
    mlp = [64, 32]
    in_channel = D1 + D2

    key = jax.random.PRNGKey(0)
    k1, k2, k3, k4, kp = jax.random.split(key, 5)
    xyz1 = jax.random.normal(k1, (B, C, N), jnp.float32)
    xyz2 = jax.random.normal(k2, (B, C, S), jnp.float32)
    points1 = jax.random.normal(k3, (B, D1, N), jnp.float32)
    points2 = jax.random.normal(k4, (B, D2, S), jnp.float32)
    params = init_params(kp, in_channel, mlp)

    ref = jax.block_until_ready(ref_forward(xyz1, xyz2, points1, points2, params))

    # 1) f32 compute path (exact divides, fused first layer, single 512 tile): strict.
    out_f32 = jax.block_until_ready(
        pointnet_fp_forward(xyz1, xyz2, points1, points2, params,
                            compute_dtype=jnp.float32))
    assert out_f32.shape == (B, mlp[-1], N), out_f32.shape
    _check(out_f32, ref, atol=2e-3, rtol=2e-3, max_mean=3e-3)

    # 2) Default bf16 path (bf16 MXU + bf16 output + approx reciprocals): looser.
    out_bf16 = jax.block_until_ready(
        pointnet_fp_forward(xyz1, xyz2, points1, points2, params))
    assert out_bf16.shape == (B, mlp[-1], N), out_bf16.shape
    assert out_bf16.dtype == jnp.bfloat16, out_bf16.dtype
    _check(out_bf16, ref, atol=5e-2, rtol=5e-2, max_mean=2e-2)

    # 3) Unfused first layer + small tiles (multi-tile grid), f32 strict.
    out_unf = jax.block_until_ready(
        pointnet_fp_forward(xyz1, xyz2, points1, points2, params,
                            compute_dtype=jnp.float32, fuse_first=False,
                            max_tile_n=128))
    _check(out_unf, ref, atol=2e-3, rtol=2e-3, max_mean=3e-3)

    # 4) points1 = None path.
    params_np1 = init_params(kp, D2, mlp)
    out_np1 = jax.block_until_ready(
        pointnet_fp_forward(xyz1, xyz2, None, points2, params_np1,
                            compute_dtype=jnp.float32))
    ref_np1 = jax.block_until_ready(
        ref_forward(xyz1, xyz2, None, points2, params_np1))
    assert out_np1.shape == (B, mlp[-1], N), out_np1.shape
    _check(out_np1, ref_np1, atol=2e-3, rtol=2e-3, max_mean=3e-3)

    # 5) B == 1: tile selection keeps >= 2 grid programs (v7x 2nd TensorCore).
    out_b1 = jax.block_until_ready(
        pointnet_fp_forward(xyz1[:1], xyz2[:1], points1[:1], points2[:1], params,
                            compute_dtype=jnp.float32))
    assert out_b1.shape == (1, mlp[-1], N), out_b1.shape
    _check(out_b1, ref[:1], atol=2e-3, rtol=2e-3, max_mean=3e-3)

    print("KERNEL_OK")
</pallas_src>

<mosaic_0001>
module attributes {stable_mosaic.version = 11 : i64} {
  func.func @kernel(%arg0: i32, %arg1: i32, %arg2: memref<1x64x15xbf16, #tpu.memory_space<vmem>>, %arg3: memref<1x15x512xbf16, #tpu.memory_space<vmem>>, %arg4: memref<1x16x512xf32, #tpu.memory_space<vmem>>, %arg5: memref<1x64x64xf32, #tpu.memory_space<vmem>>, %arg6: memref<64x16xf32, #tpu.memory_space<vmem>>, %arg7: memref<64x1xf32, #tpu.memory_space<vmem>>, %arg8: memref<32x64xf32, #tpu.memory_space<vmem>>, %arg9: memref<32x1xf32, #tpu.memory_space<vmem>>, %arg10: memref<1x32x512xf32, #tpu.memory_space<vmem>>) attributes {dimension_semantics = [#tpu.dimension_semantics<parallel>, #tpu.dimension_semantics<parallel>], iteration_bounds = array<i64: 2, 1>, scalar_prefetch = 0 : i64, scratch_operands = 0 : i64, tpu.core_type = #tpu.core_type<tc>, window_params = [{transform_indices = @transform_0, window_bounds = array<i64: 1, 64, 15>}, {transform_indices = @transform_1, window_bounds = array<i64: 1, 15, 512>}, {transform_indices = @transform_2, window_bounds = array<i64: 1, 16, 512>}, {transform_indices = @transform_3, window_bounds = array<i64: 1, 64, 64>}, {pipeline_mode = #tpu.pipeline_mode<synchronous>, transform_indices = @transform_4, window_bounds = array<i64: 64, 16>}, {pipeline_mode = #tpu.pipeline_mode<synchronous>, transform_indices = @transform_5, window_bounds = array<i64: 64, 1>}, {pipeline_mode = #tpu.pipeline_mode<synchronous>, transform_indices = @transform_6, window_bounds = array<i64: 32, 64>}, {pipeline_mode = #tpu.pipeline_mode<synchronous>, transform_indices = @transform_7, window_bounds = array<i64: 32, 1>}, {transform_indices = @transform_8, window_bounds = array<i64: 1, 32, 512>}]} {
    %c0 = arith.constant 0 : index
    %c0_0 = arith.constant 0 : index
    %c0_1 = arith.constant 0 : index
    %0 = vector.load %arg2[%c0, %c0_0, %c0_1] : memref<1x64x15xbf16, #tpu.memory_space<vmem>>, vector<1x64x15xbf16>
    %1 = vector.shape_cast %0 : vector<1x64x15xbf16> to vector<64x15xbf16>
    %c0_2 = arith.constant 0 : index
    %c0_3 = arith.constant 0 : index
    %c0_4 = arith.constant 0 : index
    %2 = vector.load %arg3[%c0_2, %c0_3, %c0_4] : memref<1x15x512xbf16, #tpu.memory_space<vmem>>, vector<1x15x512xbf16>
    %3 = vector.shape_cast %2 : vector<1x15x512xbf16> to vector<15x512xbf16>
    %cst = arith.constant dense<0.000000e+00> : vector<64x512xf32>
    %4 = tpu.matmul %1, %3, %cst {dimension_numbers = #tpu.dot_dimension_numbers<[1], [0], [0], [1], [0, 0, 1, 1], [], []>} : vector<64x15xbf16>, vector<15x512xbf16>, vector<64x512xf32> -> vector<64x512xf32>
    %cst_5 = arith.constant dense<0x7F800000> : vector<512xf32>
    %5 = vector.multi_reduction <minimumf>, %4, %cst_5 [0] : vector<64x512xf32> to vector<512xf32>
    %6 = vector.shape_cast %5 : vector<512xf32> to vector<1x512xf32>
    %cst_6 = arith.constant 1.000000e-10 : f32
    %7 = vector.broadcast %cst_6 : f32 to vector<1x512xf32>
    %8 = arith.maximumf %6, %7 : vector<1x512xf32>
    %9 = vector.broadcast %6 : vector<1x512xf32> to vector<64x512xf32>
    %10 = arith.cmpf oeq, %4, %9 : vector<64x512xf32>
    %11 = arith.extui %10 : vector<64x512xi1> to vector<64x512xi32>
    %12 = arith.sitofp %11 : vector<64x512xi32> to vector<64x512xf32>
    %cst_7 = arith.constant 1.000000e+30 : f32
    %13 = vector.broadcast %cst_7 : f32 to vector<64x512xf32>
    %14 = arith.select %10, %13, %4 : vector<64x512xi1>, vector<64x512xf32>
    %cst_8 = arith.constant dense<0x7F800000> : vector<512xf32>
    %15 = vector.multi_reduction <minimumf>, %14, %cst_8 [0] : vector<64x512xf32> to vector<512xf32>
    %16 = vector.shape_cast %15 : vector<512xf32> to vector<1x512xf32>
    %cst_9 = arith.constant 1.000000e-10 : f32
    %17 = vector.broadcast %cst_9 : f32 to vector<1x512xf32>
    %18 = arith.maximumf %16, %17 : vector<1x512xf32>
    %cst_10 = arith.constant 1.000000e+00 : f32
    %19 = vector.broadcast %cst_10 : f32 to vector<1x512xf32>
    %20 = arith.divf %19, %18 : vector<1x512xf32>
    %21 = arith.mulf %8, %20 : vector<1x512xf32>
    %22 = vector.broadcast %16 : vector<1x512xf32> to vector<64x512xf32>
    %23 = arith.cmpf oeq, %14, %22 : vector<64x512xf32>
    %cst_11 = arith.constant 0.000000e+00 : f32
    %24 = vector.shape_cast %21 : vector<1x512xf32> to vector<1x512xf32>
    %25 = vector.broadcast %24 : vector<1x512xf32> to vector<64x512xf32>
    %26 = vector.broadcast %cst_11 : f32 to vector<64x512xf32>
    %27 = arith.select %23, %25, %26 : vector<64x512xi1>, vector<64x512xf32>
    %28 = arith.addf %12, %27 : vector<64x512xf32>
    %cst_12 = arith.constant 1.000000e+30 : f32
    %29 = vector.broadcast %cst_12 : f32 to vector<64x512xf32>
    %30 = arith.select %23, %29, %14 : vector<64x512xi1>, vector<64x512xf32>
    %cst_13 = arith.constant dense<0x7F800000> : vector<512xf32>
    %31 = vector.multi_reduction <minimumf>, %30, %cst_13 [0] : vector<64x512xf32> to vector<512xf32>
    %32 = vector.shape_cast %31 : vector<512xf32> to vector<1x512xf32>
    %cst_14 = arith.constant 1.000000e-10 : f32
    %33 = vector.broadcast %cst_14 : f32 to vector<1x512xf32>
    %34 = arith.maximumf %32, %33 : vector<1x512xf32>
    %cst_15 = arith.constant 1.000000e+00 : f32
    %35 = vector.broadcast %cst_15 : f32 to vector<1x512xf32>
    %36 = arith.divf %35, %34 : vector<1x512xf32>
    %37 = arith.mulf %8, %36 : vector<1x512xf32>
    %38 = vector.broadcast %32 : vector<1x512xf32> to vector<64x512xf32>
    %39 = arith.cmpf oeq, %30, %38 : vector<64x512xf32>
    %cst_16 = arith.constant 0.000000e+00 : f32
    %40 = vector.shape_cast %37 : vector<1x512xf32> to vector<1x512xf32>
    %41 = vector.broadcast %40 : vector<1x512xf32> to vector<64x512xf32>
    %42 = vector.broadcast %cst_16 : f32 to vector<64x512xf32>
    %43 = arith.select %39, %41, %42 : vector<64x512xi1>, vector<64x512xf32>
    %44 = arith.addf %28, %43 : vector<64x512xf32>
    %cst_17 = arith.constant dense<0.000000e+00> : vector<512xf32>
    %45 = vector.multi_reduction <add>, %44, %cst_17 [0] : vector<64x512xf32> to vector<512xf32>
    %46 = vector.shape_cast %45 : vector<512xf32> to vector<1x512xf32>
    %cst_18 = arith.constant 1.000000e+00 : f32
    %47 = vector.broadcast %cst_18 : f32 to vector<1x512xf32>
    %48 = arith.divf %47, %46 : vector<1x512xf32>
    %c0_19 = arith.constant 0 : index
    %c0_20 = arith.constant 0 : index
    %c0_21 = arith.constant 0 : index
    %49 = vector.load %arg5[%c0_19, %c0_20, %c0_21] : memref<1x64x64xf32, #tpu.memory_space<vmem>>, vector<1x64x64xf32>
    %50 = vector.shape_cast %49 : vector<1x64x64xf32> to vector<64x64xf32>
    %cst_22 = arith.constant dense<0.000000e+00> : vector<64x512xf32>
    %51 = tpu.matmul %50, %44, %cst_22 {dimension_numbers = #tpu.dot_dimension_numbers<[1], [0], [0], [1], [0, 0, 1, 1], [], []>} : vector<64x64xf32>, vector<64x512xf32>, vector<64x512xf32> -> vector<64x512xf32>
    %52 = vector.broadcast %48 : vector<1x512xf32> to vector<64x512xf32>
    %53 = arith.mulf %51, %52 : vector<64x512xf32>
    %c0_23 = arith.constant 0 : index
    %c0_24 = arith.constant 0 : index
    %54 = vector.load %arg6[%c0_23, %c0_24] : memref<64x16xf32, #tpu.memory_space<vmem>>, vector<64x16xf32>
    %c0_25 = arith.constant 0 : index
    %c0_26 = arith.constant 0 : index
    %c0_27 = arith.constant 0 : index
    %55 = vector.load %arg4[%c0_25, %c0_26, %c0_27] : memref<1x16x512xf32, #tpu.memory_space<vmem>>, vector<1x16x512xf32>
    %56 = vector.shape_cast %55 : vector<1x16x512xf32> to vector<16x512xf32>
    %cst_28 = arith.constant dense<0.000000e+00> : vector<64x512xf32>
    %57 = tpu.matmul %54, %56, %cst_28 {dimension_numbers = #tpu.dot_dimension_numbers<[1], [0], [0], [1], [0, 0, 1, 1], [], []>} : vector<64x16xf32>, vector<16x512xf32>, vector<64x512xf32> -> vector<64x512xf32>
    %58 = arith.addf %53, %57 : vector<64x512xf32>
    %c0_29 = arith.constant 0 : index
    %c0_30 = arith.constant 0 : index
    %59 = vector.load %arg7[%c0_29, %c0_30] : memref<64x1xf32, #tpu.memory_space<vmem>>, vector<64x1xf32>
    %60 = vector.broadcast %59 : vector<64x1xf32> to vector<64x512xf32>
    %61 = arith.addf %58, %60 : vector<64x512xf32>
    %cst_31 = arith.constant 0.000000e+00 : f32
    %62 = vector.broadcast %cst_31 : f32 to vector<64x512xf32>
    %63 = arith.maximumf %61, %62 : vector<64x512xf32>
    %c0_32 = arith.constant 0 : index
    %c0_33 = arith.constant 0 : index
    %64 = vector.load %arg8[%c0_32, %c0_33] : memref<32x64xf32, #tpu.memory_space<vmem>>, vector<32x64xf32>
    %cst_34 = arith.constant dense<0.000000e+00> : vector<32x512xf32>
    %65 = tpu.matmul %64, %63, %cst_34 {dimension_numbers = #tpu.dot_dimension_numbers<[1], [0], [0], [1], [0, 0, 1, 1], [], []>} : vector<32x64xf32>, vector<64x512xf32>, vector<32x512xf32> -> vector<32x512xf32>
    %c0_35 = arith.constant 0 : index
    %c0_36 = arith.constant 0 : index
    %66 = vector.load %arg9[%c0_35, %c0_36] : memref<32x1xf32, #tpu.memory_space<vmem>>, vector<32x1xf32>
    %67 = vector.broadcast %66 : vector<32x1xf32> to vector<32x512xf32>
    %68 = arith.addf %65, %67 : vector<32x512xf32>
    %cst_37 = arith.constant 0.000000e+00 : f32
    %69 = vector.broadcast %cst_37 : f32 to vector<32x512xf32>
    %70 = arith.maximumf %68, %69 : vector<32x512xf32>
    %c0_38 = arith.constant 0 : index
    %c0_39 = arith.constant 0 : index
    %c0_40 = arith.constant 0 : index
    %71 = vector.load %arg10[%c0_38, %c0_39, %c0_40] : memref<1x32x512xf32, #tpu.memory_space<vmem>>, vector<1x32x512xf32>
    %72 = vector.shape_cast %71 : vector<1x32x512xf32> to vector<32x512xf32>
    %73 = vector.shape_cast %70 : vector<32x512xf32> to vector<1x32x512xf32>
    tpu.vector_store %arg10[%c0_38, %c0_39, %c0_40], %73 {strides = array<i32>} : memref<1x32x512xf32, #tpu.memory_space<vmem>>, vector<1x32x512xf32>,
    return
  }
  func.func @transform_0(%arg0: i32, %arg1: i32) -> (i32, i32, i32) {
    %c0_i32 = arith.constant 0 : i32
    %c0_i32_0 = arith.constant 0 : i32
    %c0_i32_1 = arith.constant 0 : i32
    return %arg0, %c0_i32, %c0_i32_0 : i32, i32, i32
  }
  func.func @transform_1(%arg0: i32, %arg1: i32) -> (i32, i32, i32) {
    %c0_i32 = arith.constant 0 : i32
    %c0_i32_0 = arith.constant 0 : i32
    return %arg0, %c0_i32, %arg1 : i32, i32, i32
  }
  func.func @transform_2(%arg0: i32, %arg1: i32) -> (i32, i32, i32) {
    %c0_i32 = arith.constant 0 : i32
    %c0_i32_0 = arith.constant 0 : i32
    return %arg0, %c0_i32, %arg1 : i32, i32, i32
  }
  func.func @transform_3(%arg0: i32, %arg1: i32) -> (i32, i32, i32) {
    %c0_i32 = arith.constant 0 : i32
    %c0_i32_0 = arith.constant 0 : i32
    %c0_i32_1 = arith.constant 0 : i32
    return %arg0, %c0_i32, %c0_i32_0 : i32, i32, i32
  }
  func.func @transform_4(%arg0: i32, %arg1: i32) -> (i32, i32) {
    %c0_i32 = arith.constant 0 : i32
    %c0_i32_0 = arith.constant 0 : i32
    %c0_i32_1 = arith.constant 0 : i32
    return %c0_i32, %c0_i32_0 : i32, i32
  }
  func.func @transform_5(%arg0: i32, %arg1: i32) -> (i32, i32) {
    %c0_i32 = arith.constant 0 : i32
    %c0_i32_0 = arith.constant 0 : i32
    %c0_i32_1 = arith.constant 0 : i32
    return %c0_i32, %c0_i32_0 : i32, i32
  }
  func.func @transform_6(%arg0: i32, %arg1: i32) -> (i32, i32) {
    %c0_i32 = arith.constant 0 : i32
    %c0_i32_0 = arith.constant 0 : i32
    %c0_i32_1 = arith.constant 0 : i32
    return %c0_i32, %c0_i32_0 : i32, i32
  }
  func.func @transform_7(%arg0: i32, %arg1: i32) -> (i32, i32) {
    %c0_i32 = arith.constant 0 : i32
    %c0_i32_0 = arith.constant 0 : i32
    %c0_i32_1 = arith.constant 0 : i32
    return %c0_i32, %c0_i32_0 : i32, i32
  }
  func.func @transform_8(%arg0: i32, %arg1: i32) -> (i32, i32, i32) {
    %c0_i32 = arith.constant 0 : i32
    %c0_i32_0 = arith.constant 0 : i32
    return %arg0, %c0_i32, %arg1 : i32, i32, i32
  }
}

</mosaic_0001>

<llo_original>
// kernel: tpu_custom_call.1
$region0: #{tpu_custom_call.1}
  #allocation0 [shape = 'u32[]', space=smem, size = 0x4, offset = 0x4, fixed_abs, tag = 'smem constant byte address 0x4 - core index']
  #allocation1 [shape = 'u32[144,128]{1,0:T(1,128)}', space=vmem, size = 0x12000, scoped, tag = 'internal scratch']
  %s0 = inlined_call_operand.vmem [shape: bf16[2,64,15], index: 0, kind: input, shape index: {}]
  %s1 = inlined_call_operand.vmem [shape: bf16[2,15,512], index: 1, kind: input, shape index: {}]
  %s2 = inlined_call_operand.vmem [shape: f32[2,16,512], index: 2, kind: input, shape index: {}]
  %s3 = inlined_call_operand.vmem [shape: f32[2,64,64], index: 3, kind: input, shape index: {}]
  %s4 = inlined_call_operand.vmem [shape: f32[64,16], index: 4, kind: input, shape index: {}]
  %s5 = inlined_call_operand.vmem [shape: f32[64,1], index: 5, kind: input, shape index: {}]
  %s6 = inlined_call_operand.vmem [shape: f32[32,64], index: 6, kind: input, shape index: {}]
  %s7 = inlined_call_operand.vmem [shape: f32[32,1], index: 7, kind: input, shape index: {}]
  %s8 = inlined_call_operand.hbm [shape: f32[2,32,512], index: 8, kind: output, shape index: {}]
  %s9 = sld [smem:[#allocation0]]
  $region65: #{tpu_custom_call.1} parent=0
    _
  %s11 = ssub.s32 1, %s9
  %s12 = scalar_select 0, %s11, %s9
  $region1: #{tpu_custom_call.1} parent=0
    #allocation2 [shape = 'u8[131072]{0}', space=vmem, size = 0x20000, scoped, tag = 'output window, operand 0']
    #allocation3 [shape = 's32[2]{0}', space=sflag, size = 0x8, scoped, tag = 'scoped memory for tpu_custom_call.1']
    %13 = vsyncpa [#allocation3], 0
    %s14 = scalar_lea.sflag [#allocation3], 1
    %15 = vsyncpa %s14, 0
    loop: start=0, step=1, limit=4
    $region2: #{tpu_custom_call.1} parent=1 // loop_pre_header
      _
    $region3: #{tpu_custom_call.1} parent=1 // loop_header
      %s17 = sphi 0, %s21
      %p18 = scmp.ge.s32.totalorder %s17, 4
      %s24 = sphi 0, %s36
      %s25 = sphi 0, %s32
      %s26 = sphi 0, %s24
      %s27 = sphi 0, %s25
      %s28 = sphi 0, %s26
      %s29 = sphi 0, %s27
      %s39 = sphi 0, %s41
      %s42 = sphi 0, %s39
      %s43 = sphi 0, %s42
      %s59 = sphi 0, %s43
      %s67 = sphi 0, %s69
      %s70 = sphi 0, %s67
      %s71 = sphi 0, %s70
      %s87 = sphi 0, %s71
      %s95 = sphi 0, %s97
      %s98 = sphi 0, %s95
      %s99 = sphi 0, %s98
      %s115 = sphi 0, %s99
      %s121 = sphi 0, %s123
      %s124 = sphi 0, %s121
      %s125 = sphi 0, %s124
      %s141 = sphi 0, %s125
      %s145 = sphi 0, %s145
      %s147 = sphi 0, %s145
      %s148 = sphi 0, %s147
      %s162 = sphi 0, %s148
      %s166 = sphi 0, %s166
      %s168 = sphi 0, %s166
      %s169 = sphi 0, %s168
      %s183 = sphi 0, %s169
      %s187 = sphi 0, %s187
      %s189 = sphi 0, %s187
      %s190 = sphi 0, %s189
      %s204 = sphi 0, %s190
      %s208 = sphi 0, %s208
      %s210 = sphi 0, %s208
      %s211 = sphi 0, %s210
      %s225 = sphi 0, %s211
      %s233 = sphi 0, %s235
      %s236 = sphi 0, %s233
      %s237 = sphi 0, %s236
      %s253 = sphi 0, %s237
    $region4: #{tpu_custom_call.1} parent=1 // loop_header_branch
      %20 = sbr.rel (%p18) target = $region8
    $region5: #{tpu_custom_call.1} parent=1 // loop_body
      %s22 = ssub.s32 %s17, 1
      %s23 = ssub.s32 %s17, 2
      %s30 = sadd.s32 1, %s25
      %p31 = scmp.ge.s32.totalorder %s30, 1
      %s32 = scalar_select %p31, 0, %s30
      %s33 = sadd.s32 1, %s24
      %s34 = scalar_select %p31, %s33, %s24
      %p35 = scmp.ge.s32.totalorder %s34, 2
      %s36 = scalar_select %p35, 0, %s34
      %s37 = ssub.s32 %s24, %s36
      %p38 = scmp.eq.s32.totalorder %s37, 0
      %s40 = sadd.s32 %s39, 1
      %s41 = scalar_select %p38, %s39, %s40
      %p44 = pneg %p38
      %p45 = scmp.eq.s32.totalorder %s17, 1
      %p46 = por %p44, %p45
      %p47 = scmp.ne.s32.totalorder %s39, %s42
      %p48 = scmp.eq.s32.totalorder %s17, 0
      %p49 = por %p47, %p48
      %p50 = scmp.ne.s32.totalorder %s39, %s42
      %p51 = scmp.eq.s32.totalorder %s22, 1
      %p52 = por %p50, %p51
      %p53 = scmp.ne.s32.totalorder %s42, %s43
      %p54 = scmp.eq.s32.totalorder %s22, 0
      %p55 = por %p53, %p54
      %p56 = scmp.ne.s32.totalorder %s42, %s43
      %p57 = scmp.eq.s32.totalorder %s23, 1
      %p58 = por %p56, %p57
      %p60 = scmp.ne.s32.totalorder %s43, %s59
      %p61 = scmp.eq.s32.totalorder %s23, 0
      %p62 = por %p60, %p61
      %s63 = ssub.s32 %s24, %s36
      %s64 = ssub.s32 %s25, %s32
      %s65 = sor.u32 %s63, %s64
      %p66 = scmp.eq.s32.totalorder %s65, 0
      %s68 = sadd.s32 %s67, 1
      %s69 = scalar_select %p66, %s67, %s68
      %p72 = pneg %p66
      %p73 = scmp.eq.s32.totalorder %s17, 1
      %p74 = por %p72, %p73
      %p75 = scmp.ne.s32.totalorder %s67, %s70
      %p76 = scmp.eq.s32.totalorder %s17, 0
      %p77 = por %p75, %p76
      %p78 = scmp.ne.s32.totalorder %s67, %s70
      %p79 = scmp.eq.s32.totalorder %s22, 1
      %p80 = por %p78, %p79
      %p81 = scmp.ne.s32.totalorder %s70, %s71
      %p82 = scmp.eq.s32.totalorder %s22, 0
      %p83 = por %p81, %p82
      %p84 = scmp.ne.s32.totalorder %s70, %s71
      %p85 = scmp.eq.s32.totalorder %s23, 1
      %p86 = por %p84, %p85
      %p88 = scmp.ne.s32.totalorder %s71, %s87
      %p89 = scmp.eq.s32.totalorder %s23, 0
      %p90 = por %p88, %p89
      %s91 = ssub.s32 %s24, %s36
      %s92 = ssub.s32 %s25, %s32
      %s93 = sor.u32 %s91, %s92
      %p94 = scmp.eq.s32.totalorder %s93, 0
      %s96 = sadd.s32 %s95, 1
      %s97 = scalar_select %p94, %s95, %s96
      %p100 = pneg %p94
      %p101 = scmp.eq.s32.totalorder %s17, 1
      %p102 = por %p100, %p101
      %p103 = scmp.ne.s32.totalorder %s95, %s98
      %p104 = scmp.eq.s32.totalorder %s17, 0
      %p105 = por %p103, %p104
      %p106 = scmp.ne.s32.totalorder %s95, %s98
      %p107 = scmp.eq.s32.totalorder %s22, 1
      %p108 = por %p106, %p107
      %p109 = scmp.ne.s32.totalorder %s98, %s99
      %p110 = scmp.eq.s32.totalorder %s22, 0
      %p111 = por %p109, %p110
      %p112 = scmp.ne.s32.totalorder %s98, %s99
      %p113 = scmp.eq.s32.totalorder %s23, 1
      %p114 = por %p112, %p113
      %p116 = scmp.ne.s32.totalorder %s99, %s115
      %p117 = scmp.eq.s32.totalorder %s23, 0
      %p118 = por %p116, %p117
      %s119 = ssub.s32 %s24, %s36
      %p120 = scmp.eq.s32.totalorder %s119, 0
      %s122 = sadd.s32 %s121, 1
      %s123 = scalar_select %p120, %s121, %s122
      %p126 = pneg %p120
      %p127 = scmp.eq.s32.totalorder %s17, 1
      %p128 = por %p126, %p127
      %p129 = scmp.ne.s32.totalorder %s121, %s124
      %p130 = scmp.eq.s32.totalorder %s17, 0
      %p131 = por %p129, %p130
      %p132 = scmp.ne.s32.totalorder %s121, %s124
      %p133 = scmp.eq.s32.totalorder %s22, 1
      %p134 = por %p132, %p133
      %p135 = scmp.ne.s32.totalorder %s124, %s125
      %p136 = scmp.eq.s32.totalorder %s22, 0
      %p137 = por %p135, %p136
      %p138 = scmp.ne.s32.totalorder %s124, %s125
      %p139 = scmp.eq.s32.totalorder %s23, 1
      %p140 = por %p138, %p139
      %p142 = scmp.ne.s32.totalorder %s125, %s141
      %p143 = scmp.eq.s32.totalorder %s23, 0
      %p144 = por %p142, %p143
      %s146 = sadd.s32 %s145, 1
      %p149 = scmp.eq.s32.totalorder %s17, 1
      %p150 = scmp.ne.s32.totalorder %s145, %s147
      %p151 = scmp.eq.s32.totalorder %s17, 0
      %p152 = por %p150, %p151
      %p153 = scmp.ne.s32.totalorder %s145, %s147
      %p154 = scmp.eq.s32.totalorder %s22, 1
      %p155 = por %p153, %p154
      %p156 = scmp.ne.s32.totalorder %s147, %s148
      %p157 = scmp.eq.s32.totalorder %s22, 0
      %p158 = por %p156, %p157
      %p159 = scmp.ne.s32.totalorder %s147, %s148
      %p160 = scmp.eq.s32.totalorder %s23, 1
      %p161 = por %p159, %p160
      %p163 = scmp.ne.s32.totalorder %s148, %s162
      %p164 = scmp.eq.s32.totalorder %s23, 0
      %p165 = por %p163, %p164
      %s167 = sadd.s32 %s166, 1
      %p170 = scmp.eq.s32.totalorder %s17, 1
      %p171 = scmp.ne.s32.totalorder %s166, %s168
      %p172 = scmp.eq.s32.totalorder %s17, 0
      %p173 = por %p171, %p172
      %p174 = scmp.ne.s32.totalorder %s166, %s168
      %p175 = scmp.eq.s32.totalorder %s22, 1
      %p176 = por %p174, %p175
      %p177 = scmp.ne.s32.totalorder %s168, %s169
      %p178 = scmp.eq.s32.totalorder %s22, 0
      %p179 = por %p177, %p178
      %p180 = scmp.ne.s32.totalorder %s168, %s169
      %p181 = scmp.eq.s32.totalorder %s23, 1
      %p182 = por %p180, %p181
      %p184 = scmp.ne.s32.totalorder %s169, %s183
      %p185 = scmp.eq.s32.totalorder %s23, 0
      %p186 = por %p184, %p185
      %s188 = sadd.s32 %s187, 1
      %p191 = scmp.eq.s32.totalorder %s17, 1
      %p192 = scmp.ne.s32.totalorder %s187, %s189
      %p193 = scmp.eq.s32.totalorder %s17, 0
      %p194 = por %p192, %p193
      %p195 = scmp.ne.s32.totalorder %s187, %s189
      %p196 = scmp.eq.s32.totalorder %s22, 1
      %p197 = por %p195, %p196
      %p198 = scmp.ne.s32.totalorder %s189, %s190
      %p199 = scmp.eq.s32.totalorder %s22, 0
      %p200 = por %p198, %p199
      %p201 = scmp.ne.s32.totalorder %s189, %s190
      %p202 = scmp.eq.s32.totalorder %s23, 1
      %p203 = por %p201, %p202
      %p205 = scmp.ne.s32.totalorder %s190, %s204
      %p206 = scmp.eq.s32.totalorder %s23, 0
      %p207 = por %p205, %p206
      %s209 = sadd.s32 %s208, 1
      %p212 = scmp.eq.s32.totalorder %s17, 1
      %p213 = scmp.ne.s32.totalorder %s208, %s210
      %p214 = scmp.eq.s32.totalorder %s17, 0
      %p215 = por %p213, %p214
      %p216 = scmp.ne.s32.totalorder %s208, %s210
      %p217 = scmp.eq.s32.totalorder %s22, 1
      %p218 = por %p216, %p217
      %p219 = scmp.ne.s32.totalorder %s210, %s211
      %p220 = scmp.eq.s32.totalorder %s22, 0
      %p221 = por %p219, %p220
      %p222 = scmp.ne.s32.totalorder %s210, %s211
      %p223 = scmp.eq.s32.totalorder %s23, 1
      %p224 = por %p222, %p223
      %p226 = scmp.ne.s32.totalorder %s211, %s225
      %p227 = scmp.eq.s32.totalorder %s23, 0
      %p228 = por %p226, %p227
      %s229 = ssub.s32 %s24, %s36
      %s230 = ssub.s32 %s25, %s32
      %s231 = sor.u32 %s229, %s230
      %p232 = scmp.eq.s32.totalorder %s231, 0
      %s234 = sadd.s32 %s233, 1
      %s235 = scalar_select %p232, %s233, %s234
      %p238 = pneg %p232
      %p239 = scmp.eq.s32.totalorder %s17, 1
      %p240 = por %p238, %p239
      %p241 = scmp.ne.s32.totalorder %s233, %s236
      %p242 = scmp.eq.s32.totalorder %s17, 0
      %p243 = por %p241, %p242
      %p244 = scmp.ne.s32.totalorder %s233, %s236
      %p245 = scmp.eq.s32.totalorder %s22, 1
      %p246 = por %p244, %p245
      %p247 = scmp.ne.s32.totalorder %s236, %s237
      %p248 = scmp.eq.s32.totalorder %s22, 0
      %p249 = por %p247, %p248
      %p250 = scmp.ne.s32.totalorder %s236, %s237
      %p251 = scmp.eq.s32.totalorder %s23, 1
      %p252 = por %p250, %p251
      %p254 = scmp.ne.s32.totalorder %s237, %s253
      %p255 = scmp.eq.s32.totalorder %s23, 0
      %p256 = por %p254, %p255
      %p257 = scmp.le.s32.totalorder 1, %s17
      %p258 = scmp.lt.s32.totalorder %s17, 3
      %p259 = pnand %p257, %p258
      %p260 = pneg %p259
      // Predicated region
      $region9: #{tpu_custom_call.1} parent=5 // pred_check
        _
      $region10: #{tpu_custom_call.1} parent=5 // pred_check_branch
        %262 = sbr.rel (%p259) target = $region12
      $region11: #{tpu_custom_call.1} parent=5 // pred_region
        %s263 = ssub.s32 %s17, 1
        // Predicated region
        $region13: #{tpu_custom_call.1} parent=11 // pred_check
          %p264 = pneg %p158
        $region14: #{tpu_custom_call.1} parent=11 // pred_check_branch
          %266 = sbr.rel (%p264) target = $region16
        $region15: #{tpu_custom_call.1} parent=11 // pred_region
          _
        $region16: #{tpu_custom_call.1} parent=11 // pred_fallthru
          _
        // Predicated region
        $region17: #{tpu_custom_call.1} parent=11 // pred_check
          %p267 = pneg %p179
        $region18: #{tpu_custom_call.1} parent=11 // pred_check_branch
          %269 = sbr.rel (%p267) target = $region20
        $region19: #{tpu_custom_call.1} parent=11 // pred_region
          _
        $region20: #{tpu_custom_call.1} parent=11 // pred_fallthru
          _
        // Predicated region
        $region21: #{tpu_custom_call.1} parent=11 // pred_check
          %p270 = pneg %p200
        $region22: #{tpu_custom_call.1} parent=11 // pred_check_branch
          %272 = sbr.rel (%p270) target = $region24
        $region23: #{tpu_custom_call.1} parent=11 // pred_region
          _
        $region24: #{tpu_custom_call.1} parent=11 // pred_fallthru
          _
        // Predicated region
        $region25: #{tpu_custom_call.1} parent=11 // pred_check
          %p273 = pneg %p221
        $region26: #{tpu_custom_call.1} parent=11 // pred_check_branch
          %275 = sbr.rel (%p273) target = $region28
        $region27: #{tpu_custom_call.1} parent=11 // pred_region
          _
        $region28: #{tpu_custom_call.1} parent=11 // pred_fallthru
          _
      $region12: #{tpu_custom_call.1} parent=5 // pred_fallthru
        _
      %p276 = scmp.lt.s32.totalorder %s17, 2
      // Predicated region
      $region29: #{tpu_custom_call.1} parent=5 // pred_check
        %p277 = pneg %p276
      $region30: #{tpu_custom_call.1} parent=5 // pred_check_branch
        %279 = sbr.rel (%p277) target = $region32
      $region31: #{tpu_custom_call.1} parent=5 // pred_region
        // Predicated region
        $region33: #{tpu_custom_call.1} parent=31 // pred_check
          %p280 = pneg %p49
        $region34: #{tpu_custom_call.1} parent=31 // pred_check_branch
          %282 = sbr.rel (%p280) target = $region36
        $region35: #{tpu_custom_call.1} parent=31 // pred_region
          %p283 = scmp.lt.s32.totalorder %s24, 1
          %s284 = scalar_select %p283, %s24, 1
          %s285 = smul.addr %s284, 8
          %s286 = smul.addr %s285, 4
          %s287 = scalar_lea.vmem %s0, %s286
        $region36: #{tpu_custom_call.1} parent=31 // pred_fallthru
          _
        // Predicated region
        $region37: #{tpu_custom_call.1} parent=31 // pred_check
          %p288 = pneg %p77
        $region38: #{tpu_custom_call.1} parent=31 // pred_check_branch
          %290 = sbr.rel (%p288) target = $region40
        $region39: #{tpu_custom_call.1} parent=31 // pred_region
          %s291 = smul.u32 4, %s25
          %p292 = scmp.lt.s32.totalorder %s24, 1
          %s293 = scalar_select %p292, %s24, 1
          %p294 = scmp.lt.s32.totalorder %s291, 3
          %s295 = scalar_select %p294, %s291, 3
          %s296 = smul.addr %s293, 8
          %s297 = sadd.s32 %s295, %s296
          %s298 = smul.addr %s297, 4
          %s299 = scalar_lea.vmem %s1, %s298
          %s300 = smul.u32 4, %s25
        $region40: #{tpu_custom_call.1} parent=31 // pred_fallthru
          _
        // Predicated region
        $region41: #{tpu_custom_call.1} parent=31 // pred_check
          %p301 = pneg %p105
        $region42: #{tpu_custom_call.1} parent=31 // pred_check_branch
          %303 = sbr.rel (%p301) target = $region44
        $region43: #{tpu_custom_call.1} parent=31 // pred_region
          %s304 = smul.u32 4, %s25
          %p305 = scmp.lt.s32.totalorder %s24, 1
          %s306 = scalar_select %p305, %s24, 1
          %p307 = scmp.lt.s32.totalorder %s304, 3
          %s308 = scalar_select %p307, %s304, 3
          %s309 = smul.addr %s306, 8
          %s310 = sadd.s32 %s308, %s309
          %s311 = smul.addr %s310, 8
          %s312 = scalar_lea.vmem %s2, %s311
          %s313 = smul.u32 4, %s25
        $region44: #{tpu_custom_call.1} parent=31 // pred_fallthru
          _
        // Predicated region
        $region45: #{tpu_custom_call.1} parent=31 // pred_check
          %p314 = pneg %p131
        $region46: #{tpu_custom_call.1} parent=31 // pred_check_branch
          %316 = sbr.rel (%p314) target = $region48
        $region47: #{tpu_custom_call.1} parent=31 // pred_region
          %p317 = scmp.lt.s32.totalorder %s24, 1
          %s318 = scalar_select %p317, %s24, 1
          %s319 = smul.addr %s318, 8
          %s320 = smul.addr %s319, 8
          %s321 = scalar_lea.vmem %s3, %s320
        $region48: #{tpu_custom_call.1} parent=31 // pred_fallthru
          _
      $region32: #{tpu_custom_call.1} parent=5 // pred_fallthru
        _
      %p322 = scmp.le.s32.totalorder 1, %s17
      %p323 = scmp.lt.s32.totalorder %s17, 3
      %p324 = pnand %p322, %p323
      %p325 = pneg %p324
      // Predicated region
      $region49: #{tpu_custom_call.1} parent=5 // pred_check
        _
      $region50: #{tpu_custom_call.1} parent=5 // pred_check_branch
        %327 = sbr.rel (%p324) target = $region52
      $region51: #{tpu_custom_call.1} parent=5 // pred_region
        %s328 = ssub.s32 %s17, 1
        %p329 = scmp.lt.s32.totalorder %s26, 1
        %s330 = scalar_select %p329, %s26, 1
        %s331 = smul.addr %s330, 8
        %s332 = smul.addr %s331, 4
        %s333 = scalar_lea.vmem %s0, %s332
        %p334 = pneg %p55
        %p335 = pneg %p52
        %s336 = smul.u32 4, %s27
        %p337 = scmp.lt.s32.totalorder %s26, 1
        %s338 = scalar_select %p337, %s26, 1
        %p339 = scmp.lt.s32.totalorder %s336, 3
        %s340 = scalar_select %p339, %s336, 3
        %s341 = smul.addr %s338, 8
        %s342 = sadd.s32 %s340, %s341
        %s343 = smul.addr %s342, 4
        %s344 = scalar_lea.vmem %s1, %s343
        %p345 = pneg %p83
        %p346 = pneg %p80
        %s347 = smul.u32 4, %s27
        %p348 = scmp.lt.s32.totalorder %s26, 1
        %s349 = scalar_select %p348, %s26, 1
        %p350 = scmp.lt.s32.totalorder %s347, 3
        %s351 = scalar_select %p350, %s347, 3
        %s352 = smul.addr %s349, 8
        %s353 = sadd.s32 %s351, %s352
        %s354 = smul.addr %s353, 8
        %s355 = scalar_lea.vmem %s2, %s354
        %p356 = pneg %p111
        %p357 = pneg %p108
        %p358 = scmp.lt.s32.totalorder %s26, 1
        %s359 = scalar_select %p358, %s26, 1
        %s360 = smul.addr %s359, 8
        %s361 = smul.addr %s360, 8
        %s362 = scalar_lea.vmem %s3, %s361
        %p363 = pneg %p137
        %p364 = pneg %p134
        %p365 = pneg %p158
        %p366 = pneg %p155
        %p367 = pneg %p179
        %p368 = pneg %p176
        %p369 = pneg %p200
        %p370 = pneg %p197
        %p371 = pneg %p221
        %p372 = pneg %p218
        %p373 = pneg %p249
        %p374 = pneg %p246
        %s375 = sand.u32 %s236, 1
        %s376 = scalar_lea.sflag [#allocation3], %s375
        %s377 = sand.u32 %s236, 1
        %s378 = smul.addr %s377, 128
        %s379 = scalar_lea.vmem [#allocation2], %s378
        %p380 = scmp.lt.s32.totalorder %s26, 1
        %s381 = scalar_select %p380, %s26, 1
        %s382 = smul.addr %s381, 8
        %s383 = smul.addr %s382, 4
        %s384 = scalar_lea.vmem %s0, %s383
        %s385 = smul.u32 4, %s27
        %p386 = scmp.lt.s32.totalorder %s26, 1
        %s387 = scalar_select %p386, %s26, 1
        %p388 = scmp.lt.s32.totalorder %s385, 3
        %s389 = scalar_select %p388, %s385, 3
        %s390 = smul.addr %s387, 8
        %s391 = sadd.s32 %s389, %s390
        %s392 = smul.addr %s391, 4
        %s393 = scalar_lea.vmem %s1, %s392
        %s394 = smul.u32 4, %s27
        %s395 = smul.u32 4, %s27
        %p396 = scmp.lt.s32.totalorder %s26, 1
        %s397 = scalar_select %p396, %s26, 1
        %p398 = scmp.lt.s32.totalorder %s395, 3
        %s399 = scalar_select %p398, %s395, 3
        %s400 = smul.addr %s397, 8
        %s401 = sadd.s32 %s399, %s400
        %s402 = smul.addr %s401, 8
        %s403 = scalar_lea.vmem %s2, %s402
        %s404 = smul.u32 4, %s27
        %p405 = scmp.lt.s32.totalorder %s26, 1
        %s406 = scalar_select %p405, %s26, 1
        %s407 = smul.addr %s406, 8
        %s408 = smul.addr %s407, 8
        %s409 = scalar_lea.vmem %s3, %s408
        %s410 = smul.u32 4, %s27
        %v412 = vld [vmem:[%s384] sm:$0xf]
        %v413 = vld [vmem:[%s384 + $0x4] sm:$0xf]
        %v414 = vld [vmem:[%s384 + $0x8] sm:$0xf]
        %v415 = vld [vmem:[%s384 + $0xc] sm:$0xf]
        %v416 = vld [vmem:[%s384 + $0x10] sm:$0xf]
        %v417 = vld [vmem:[%s384 + $0x14] sm:$0xf]
        %v418 = vld [vmem:[%s384 + $0x18] sm:$0xf]
        %v419 = vld [vmem:[%s384 + $0x1c] sm:$0xf]
        %v420 = vld [vmem:[%s393] sm:$0xff]
        %v421 = vld [vmem:[%s393 + $0x8] sm:$0xff]
        %v422 = vld [vmem:[%s393 + $0x10] sm:$0xff]
        %v423 = vld [vmem:[%s393 + $0x18] sm:$0xff]
        %v432 = vunpack.c.l.b16 %v412
        %v433 = vunpack.c.l.b16 %v413
        %v434 = vunpack.c.l.b16 %v414
        %v435 = vunpack.c.l.b16 %v415
        %v436 = vunpack.c.l.b16 %v416
        %v437 = vunpack.c.l.b16 %v417
        %v438 = vunpack.c.l.b16 %v418
        %v439 = vunpack.c.l.b16 %v419
        %v440 = vpack.c.b16 %v433, %v432
        %v441 = vpack.c.b16 %v435, %v434
        %v442 = vpack.c.b16 %v437, %v436
        %v443 = vpack.c.b16 %v439, %v438
        %v448 = vunpack.c.l.b16 %v420
        %v449 = vunpack.c.h.b16 %v420
        %v450 = vunpack.c.l.b16 %v421
        %v451 = vunpack.c.h.b16 %v421
        %v452 = vunpack.c.l.b16 %v422
        %v453 = vunpack.c.h.b16 %v422
        %v454 = vunpack.c.l.b16 %v423
        %v455 = vunpack.c.h.b16 %v423
        %v456 = vpack.c.b16 %v452, %v448
        %v457 = vpack.c.b16 %v453, %v449
        %v458 = vpack.c.b16 %v454, %v450
        %v459 = vpack.c.b16 %v455, %v451
        %vm460 = vcmask 121856
        %v462 = vsel %vm460, %v440, 0
        %v465 = vsel %vm460, %v441, 0
        %v468 = vsel %vm460, %v442, 0
        %v471 = vsel %vm460, %v443, 0
        %vm473 = vcmask 1046528
        %vm474 = vcmask 1047552
        %v475 = vsel %vm473, 4294967295, 65535
        %v476 = vsel %vm474, %v475, 0
        %v478 = vand.u32 %v456, %v476
        %v481 = vand.u32 %v457, %v476
        %v484 = vand.u32 %v458, %v476
        %v487 = vand.u32 %v459, %v476
        %489 = vmatprep.subr.bf16.mxu0 0
        %490 = vmatpush1.bf16.msra.mxu0 0
        %491 = vmatprep.subr.bf16.mxu0 0
        %492 = vmatpush1.bf16.msra.mxu0 0
        %493 = vmatprep.subr.bf16.mxu0 0
        %494 = vmatpush1.bf16.msra.mxu0 0
        %495 = vmatprep.subr.bf16.mxu0 0
        %496 = vmatpush1.bf16.msra.mxu0 0
        %497 = vmatprep.subr.bf16.mxu0 0
        %498 = vmatpush1.bf16.msra.mxu0 0
        %499 = vmatprep.subr.bf16.mxu0 0
        %500 = vmatpush1.bf16.msra.mxu0 0
        %501 = vmatprep.subr.bf16.mxu0 0
        %502 = vmatpush1.bf16.msra.mxu0 0
        %503 = vmatprep.subr.bf16.mxu0 %v481
        %504 = vmatpush1.bf16.msra.mxu0 %v478
        %505 = vmatprep.subr.bf16.mxu0 0
        %506 = vmatpush2.bf16.msra.mxu0 0
        %507 = vmatprep.subr.bf16.mxu0 0
        %508 = vmatpush2.bf16.msra.mxu0 0
        %509 = vmatprep.subr.bf16.mxu0 0
        %510 = vmatpush2.bf16.msra.mxu0 0
        %511 = vmatprep.subr.bf16.mxu0 0
        %512 = vmatpush2.bf16.msra.mxu0 0
        %513 = vmatprep.subr.bf16.mxu0 0
        %514 = vmatpush2.bf16.msra.mxu0 0
        %515 = vmatprep.subr.bf16.mxu0 0
        %516 = vmatpush2.bf16.msra.mxu0 0
        %517 = vmatprep.subr.bf16.mxu0 0
        %518 = vmatpush2.bf16.msra.mxu0 0
        %519 = vmatprep.subr.bf16.mxu0 0
        %520 = vmatpush2.bf16.msra.mxu0 0
        %521 = vmatprep.mubr.bf16.mxu0 0
        %522 = vmatmul.mubr.bf16.gmra.mxu0 %v462
        %v523 = vpop.f32.mrf.mxu0
        %v524 = vadd.f32 0.0, %v523
        %v525 = vpop.f32.mrf.mxu0
        %v526 = vadd.f32 0.0, %v525
        %v527 = vpop.f32.mrf.mxu0
        %v528 = vadd.f32 0.0, %v527
        %v529 = vpop.f32.mrf.mxu0
        %v530 = vadd.f32 0.0, %v529
        %531 = vmatprep.mubr.bf16.mxu0 0
        %532 = vmatmul.mubr.bf16.gmra.mxu0 %v465
        %v533 = vpop.f32.mrf.mxu0
        %v534 = vadd.f32 0.0, %v533
        %v535 = vpop.f32.mrf.mxu0
        %v536 = vadd.f32 0.0, %v535
        %v537 = vpop.f32.mrf.mxu0
        %v538 = vadd.f32 0.0, %v537
        %v539 = vpop.f32.mrf.mxu0
        %v540 = vadd.f32 0.0, %v539
        %541 = vmatprep.mubr.bf16.mxu0 0
        %542 = vmatmul.mubr.bf16.gmra.mxu0 %v468
        %v543 = vpop.f32.mrf.mxu0
        %v544 = vadd.f32 0.0, %v543
        %v545 = vpop.f32.mrf.mxu0
        %v546 = vadd.f32 0.0, %v545
        %v547 = vpop.f32.mrf.mxu0
        %v548 = vadd.f32 0.0, %v547
        %v549 = vpop.f32.mrf.mxu0
        %v550 = vadd.f32 0.0, %v549
        %551 = vmatprep.mubr.bf16.mxu0 0
        %552 = vmatmul.mubr.bf16.gmra.mxu0 %v471
        %v553 = vpop.f32.mrf.mxu0
        %v554 = vadd.f32 0.0, %v553
        %v555 = vpop.f32.mrf.mxu0
        %v556 = vadd.f32 0.0, %v555
        %v557 = vpop.f32.mrf.mxu0
        %v558 = vadd.f32 0.0, %v557
        %v559 = vpop.f32.mrf.mxu0
        %v560 = vadd.f32 0.0, %v559
        %561 = vdwg.mxu0
        %562 = vmatprep.subr.bf16.mxu0 0
        %563 = vmatpush1.bf16.msra.mxu0 0
        %564 = vmatprep.subr.bf16.mxu0 0
        %565 = vmatpush1.bf16.msra.mxu0 0
        %566 = vmatprep.subr.bf16.mxu0 0
        %567 = vmatpush1.bf16.msra.mxu0 0
        %568 = vmatprep.subr.bf16.mxu0 0
        %569 = vmatpush1.bf16.msra.mxu0 0
        %570 = vmatprep.subr.bf16.mxu0 0
        %571 = vmatpush1.bf16.msra.mxu0 0
        %572 = vmatprep.subr.bf16.mxu0 0
        %573 = vmatpush1.bf16.msra.mxu0 0
        %574 = vmatprep.subr.bf16.mxu0 0
        %575 = vmatpush1.bf16.msra.mxu0 0
        %576 = vmatprep.subr.bf16.mxu0 %v487
        %577 = vmatpush1.bf16.msra.mxu0 %v484
        %578 = vmatprep.subr.bf16.mxu0 0
        %579 = vmatpush2.bf16.msra.mxu0 0
        %580 = vmatprep.subr.bf16.mxu0 0
        %581 = vmatpush2.bf16.msra.mxu0 0
        %582 = vmatprep.subr.bf16.mxu0 0
        %583 = vmatpush2.bf16.msra.mxu0 0
        %584 = vmatprep.subr.bf16.mxu0 0
        %585 = vmatpush2.bf16.msra.mxu0 0
        %586 = vmatprep.subr.bf16.mxu0 0
        %587 = vmatpush2.bf16.msra.mxu0 0
        %588 = vmatprep.subr.bf16.mxu0 0
        %589 = vmatpush2.bf16.msra.mxu0 0
        %590 = vmatprep.subr.bf16.mxu0 0
        %591 = vmatpush2.bf16.msra.mxu0 0
        %592 = vmatprep.subr.bf16.mxu0 0
        %593 = vmatpush2.bf16.msra.mxu0 0
        %594 = vmatprep.mubr.bf16.mxu0 0
        %595 = vmatmul.mubr.bf16.gmra.mxu0 %v462
        %v596 = vpop.f32.mrf.mxu0
        %v597 = vadd.f32 0.0, %v596
        %v598 = vpop.f32.mrf.mxu0
        %v599 = vadd.f32 0.0, %v598
        %v600 = vpop.f32.mrf.mxu0
        %v601 = vadd.f32 0.0, %v600
        %v602 = vpop.f32.mrf.mxu0
        %v603 = vadd.f32 0.0, %v602
        %604 = vmatprep.mubr.bf16.mxu0 0
        %605 = vmatmul.mubr.bf16.gmra.mxu0 %v465
        %v606 = vpop.f32.mrf.mxu0
        %v607 = vadd.f32 0.0, %v606
        %v608 = vpop.f32.mrf.mxu0
        %v609 = vadd.f32 0.0, %v608
        %v610 = vpop.f32.mrf.mxu0
        %v611 = vadd.f32 0.0, %v610
        %v612 = vpop.f32.mrf.mxu0
        %v613 = vadd.f32 0.0, %v612
        %614 = vmatprep.mubr.bf16.mxu0 0
        %615 = vmatmul.mubr.bf16.gmra.mxu0 %v468
        %v616 = vpop.f32.mrf.mxu0
        %v617 = vadd.f32 0.0, %v616
        %v618 = vpop.f32.mrf.mxu0
        %v619 = vadd.f32 0.0, %v618
        %v620 = vpop.f32.mrf.mxu0
        %v621 = vadd.f32 0.0, %v620
        %v622 = vpop.f32.mrf.mxu0
        %v623 = vadd.f32 0.0, %v622
        %624 = vmatprep.mubr.bf16.mxu0 0
        %625 = vmatmul.mubr.bf16.gmra.mxu0 %v471
        %v626 = vpop.f32.mrf.mxu0
        %v627 = vadd.f32 0.0, %v626
        %v628 = vpop.f32.mrf.mxu0
        %v629 = vadd.f32 0.0, %v628
        %v630 = vpop.f32.mrf.mxu0
        %v631 = vadd.f32 0.0, %v630
        %v632 = vpop.f32.mrf.mxu0
        %v633 = vadd.f32 0.0, %v632
        %634 = vdwg.mxu0
        %v635 = vmin.f32 %v524, %v528
        %v636 = vmin.f32 %v635, %v534
        %v637 = vmin.f32 %v636, %v538
        %v638 = vmin.f32 %v637, %v544
        %v639 = vmin.f32 %v638, %v548
        %v640 = vmin.f32 %v639, %v554
        %v641 = vmin.f32 %v640, %v558
        %v642 = vrot.slane %v641, 4
        %v643 = vmin.f32 %v641, %v642
        %v644 = vrot.slane %v643, 2
        %v645 = vmin.f32 %v643, %v644
        %v646 = vrot.slane %v645, 1
        %v647 = vmin.f32 %v645, %v646
        %v648 = vmin.f32 %v526, %v530
        %v649 = vmin.f32 %v648, %v536
        %v650 = vmin.f32 %v649, %v540
        %v651 = vmin.f32 %v650, %v546
        %v652 = vmin.f32 %v651, %v550
        %v653 = vmin.f32 %v652, %v556
        %v654 = vmin.f32 %v653, %v560
        %v655 = vrot.slane %v654, 4
        %v656 = vmin.f32 %v654, %v655
        %v657 = vrot.slane %v656, 2
        %v658 = vmin.f32 %v656, %v657
        %v659 = vrot.slane %v658, 1
        %v660 = vmin.f32 %v658, %v659
        %v661 = vmin.f32 %v597, %v601
        %v662 = vmin.f32 %v661, %v607
        %v663 = vmin.f32 %v662, %v611
        %v664 = vmin.f32 %v663, %v617
        %v665 = vmin.f32 %v664, %v621
        %v666 = vmin.f32 %v665, %v627
        %v667 = vmin.f32 %v666, %v631
        %v668 = vrot.slane %v667, 4
        %v669 = vmin.f32 %v667, %v668
        %v670 = vrot.slane %v669, 2
        %v671 = vmin.f32 %v669, %v670
        %v672 = vrot.slane %v671, 1
        %v673 = vmin.f32 %v671, %v672
        %v674 = vmin.f32 %v599, %v603
        %v675 = vmin.f32 %v674, %v609
        %v676 = vmin.f32 %v675, %v613
        %v677 = vmin.f32 %v676, %v619
        %v678 = vmin.f32 %v677, %v623
        %v679 = vmin.f32 %v678, %v629
        %v680 = vmin.f32 %v679, %v633
        %v681 = vrot.slane %v680, 4
        %v682 = vmin.f32 %v680, %v681
        %v683 = vrot.slane %v682, 2
        %v684 = vmin.f32 %v682, %v683
        %v685 = vrot.slane %v684, 1
        %v686 = vmin.f32 %v684, %v685
        %v687 = vmax.f32 %v647, 1e-10
        %v688 = vmax.f32 %v660, 1e-10
        %v689 = vmax.f32 %v673, 1e-10
        %v690 = vmax.f32 %v686, 1e-10
        %vm691 = vcmp.eq.f32.partialorder %v524, %v647
        %vm692 = vcmp.eq.f32.partialorder %v526, %v660
        %vm693 = vcmp.eq.f32.partialorder %v597, %v673
        %vm694 = vcmp.eq.f32.partialorder %v599, %v686
        %vm695 = vcmp.eq.f32.partialorder %v528, %v647
        %vm696 = vcmp.eq.f32.partialorder %v530, %v660
        %vm697 = vcmp.eq.f32.partialorder %v601, %v673
        %vm698 = vcmp.eq.f32.partialorder %v603, %v686
        %vm699 = vcmp.eq.f32.partialorder %v534, %v647
        %vm700 = vcmp.eq.f32.partialorder %v536, %v660
        %vm701 = vcmp.eq.f32.partialorder %v607, %v673
        %vm702 = vcmp.eq.f32.partialorder %v609, %v686
        %vm703 = vcmp.eq.f32.partialorder %v538, %v647
        %vm704 = vcmp.eq.f32.partialorder %v540, %v660
        %vm705 = vcmp.eq.f32.partialorder %v611, %v673
        %vm706 = vcmp.eq.f32.partialorder %v613, %v686
        %vm707 = vcmp.eq.f32.partialorder %v544, %v647
        %vm708 = vcmp.eq.f32.partialorder %v546, %v660
        %vm709 = vcmp.eq.f32.partialorder %v617, %v673
        %vm710 = vcmp.eq.f32.partialorder %v619, %v686
        %vm711 = vcmp.eq.f32.partialorder %v548, %v647
        %vm712 = vcmp.eq.f32.partialorder %v550, %v660
        %vm713 = vcmp.eq.f32.partialorder %v621, %v673
        %vm714 = vcmp.eq.f32.partialorder %v623, %v686
        %vm715 = vcmp.eq.f32.partialorder %v554, %v647
        %vm716 = vcmp.eq.f32.partialorder %v556, %v660
        %vm717 = vcmp.eq.f32.partialorder %v627, %v673
        %vm718 = vcmp.eq.f32.partialorder %v629, %v686
        %vm719 = vcmp.eq.f32.partialorder %v558, %v647
        %vm720 = vcmp.eq.f32.partialorder %v560, %v660
        %vm721 = vcmp.eq.f32.partialorder %v631, %v673
        %vm722 = vcmp.eq.f32.partialorder %v633, %v686
        %v723 = vsel %vm691, 1, 0
        %v724 = vsel %vm692, 1, 0
        %v725 = vsel %vm693, 1, 0
        %v726 = vsel %vm694, 1, 0
        %v727 = vsel %vm695, 1, 0
        %v728 = vsel %vm696, 1, 0
        %v729 = vsel %vm697, 1, 0
        %v730 = vsel %vm698, 1, 0
        %v731 = vsel %vm699, 1, 0
        %v732 = vsel %vm700, 1, 0
        %v733 = vsel %vm701, 1, 0
        %v734 = vsel %vm702, 1, 0
        %v735 = vsel %vm703, 1, 0
        %v736 = vsel %vm704, 1, 0
        %v737 = vsel %vm705, 1, 0
        %v738 = vsel %vm706, 1, 0
        %v739 = vsel %vm707, 1, 0
        %v740 = vsel %vm708, 1, 0
        %v741 = vsel %vm709, 1, 0
        %v742 = vsel %vm710, 1, 0
        %v743 = vsel %vm711, 1, 0
        %v744 = vsel %vm712, 1, 0
        %v745 = vsel %vm713, 1, 0
        %v746 = vsel %vm714, 1, 0
        %v747 = vsel %vm715, 1, 0
        %v748 = vsel %vm716, 1, 0
        %v749 = vsel %vm717, 1, 0
        %v750 = vsel %vm718, 1, 0
        %v751 = vsel %vm719, 1, 0
        %v752 = vsel %vm720, 1, 0
        %v753 = vsel %vm721, 1, 0
        %v754 = vsel %vm722, 1, 0
        %v755 = vcvt.s32.f32 %v723
        %v756 = vcvt.s32.f32 %v724
        %v757 = vcvt.s32.f32 %v725
        %v758 = vcvt.s32.f32 %v726
        %v759 = vcvt.s32.f32 %v727
        %v760 = vcvt.s32.f32 %v728
        %v761 = vcvt.s32.f32 %v729
        %v762 = vcvt.s32.f32 %v730
        %v763 = vcvt.s32.f32 %v731
        %v764 = vcvt.s32.f32 %v732
        %v765 = vcvt.s32.f32 %v733
        %v766 = vcvt.s32.f32 %v734
        %v767 = vcvt.s32.f32 %v735
        %v768 = vcvt.s32.f32 %v736
        %v769 = vcvt.s32.f32 %v737
        %v770 = vcvt.s32.f32 %v738
        %v771 = vcvt.s32.f32 %v739
        %v772 = vcvt.s32.f32 %v740
        %v773 = vcvt.s32.f32 %v741
        %v774 = vcvt.s32.f32 %v742
        %v775 = vcvt.s32.f32 %v743
        %v776 = vcvt.s32.f32 %v744
        %v777 = vcvt.s32.f32 %v745
        %v778 = vcvt.s32.f32 %v746
        %v779 = vcvt.s32.f32 %v747
        %v780 = vcvt.s32.f32 %v748
        %v781 = vcvt.s32.f32 %v749
        %v782 = vcvt.s32.f32 %v750
        %v783 = vcvt.s32.f32 %v751
        %v784 = vcvt.s32.f32 %v752
        %v785 = vcvt.s32.f32 %v753
        %v786 = vcvt.s32.f32 %v754
        %v787 = vsel %vm691, 1e+30, %v524
        %v788 = vsel %vm692, 1e+30, %v526
        %v789 = vsel %vm693, 1e+30, %v597
        %v790 = vsel %vm694, 1e+30, %v599
        %v791 = vsel %vm695, 1e+30, %v528
        %v792 = vsel %vm696, 1e+30, %v530
        %v793 = vsel %vm697, 1e+30, %v601
        %v794 = vsel %vm698, 1e+30, %v603
        %v795 = vsel %vm699, 1e+30, %v534
        %v796 = vsel %vm700, 1e+30, %v536
        %v797 = vsel %vm701, 1e+30, %v607
        %v798 = vsel %vm702, 1e+30, %v609
        %v799 = vsel %vm703, 1e+30, %v538
        %v800 = vsel %vm704, 1e+30, %v540
        %v801 = vsel %vm705, 1e+30, %v611
        %v802 = vsel %vm706, 1e+30, %v613
        %v803 = vsel %vm707, 1e+30, %v544
        %v804 = vsel %vm708, 1e+30, %v546
        %v805 = vsel %vm709, 1e+30, %v617
        %v806 = vsel %vm710, 1e+30, %v619
        %v807 = vsel %vm711, 1e+30, %v548
        %v808 = vsel %vm712, 1e+30, %v550
        %v809 = vsel %vm713, 1e+30, %v621
        %v810 = vsel %vm714, 1e+30, %v623
        %v811 = vsel %vm715, 1e+30, %v554
        %v812 = vsel %vm716, 1e+30, %v556
        %v813 = vsel %vm717, 1e+30, %v627
        %v814 = vsel %vm718, 1e+30, %v629
        %v815 = vsel %vm719, 1e+30, %v558
        %v816 = vsel %vm720, 1e+30, %v560
        %v817 = vsel %vm721, 1e+30, %v631
        %v818 = vsel %vm722, 1e+30, %v633
        %v819 = vmin.f32 %v787, %v791
        %v820 = vmin.f32 %v819, %v795
        %v821 = vmin.f32 %v820, %v799
        %v822 = vmin.f32 %v821, %v803
        %v823 = vmin.f32 %v822, %v807
        %v824 = vmin.f32 %v823, %v811
        %v825 = vmin.f32 %v824, %v815
        %v826 = vrot.slane %v825, 4
        %v827 = vmin.f32 %v825, %v826
        %v828 = vrot.slane %v827, 2
        %v829 = vmin.f32 %v827, %v828
        %v830 = vrot.slane %v829, 1
        %v831 = vmin.f32 %v829, %v830
        %v832 = vmin.f32 %v788, %v792
        %v833 = vmin.f32 %v832, %v796
        %v834 = vmin.f32 %v833, %v800
        %v835 = vmin.f32 %v834, %v804
        %v836 = vmin.f32 %v835, %v808
        %v837 = vmin.f32 %v836, %v812
        %v838 = vmin.f32 %v837, %v816
        %v839 = vrot.slane %v838, 4
        %v840 = vmin.f32 %v838, %v839
        %v841 = vrot.slane %v840, 2
        %v842 = vmin.f32 %v840, %v841
        %v843 = vrot.slane %v842, 1
        %v844 = vmin.f32 %v842, %v843
        %v845 = vmin.f32 %v789, %v793
        %v846 = vmin.f32 %v845, %v797
        %v847 = vmin.f32 %v846, %v801
        %v848 = vmin.f32 %v847, %v805
        %v849 = vmin.f32 %v848, %v809
        %v850 = vmin.f32 %v849, %v813
        %v851 = vmin.f32 %v850, %v817
        %v852 = vrot.slane %v851, 4
        %v853 = vmin.f32 %v851, %v852
        %v854 = vrot.slane %v853, 2
        %v855 = vmin.f32 %v853, %v854
        %v856 = vrot.slane %v855, 1
        %v857 = vmin.f32 %v855, %v856
        %v858 = vmin.f32 %v790, %v794
        %v859 = vmin.f32 %v858, %v798
        %v860 = vmin.f32 %v859, %v802
        %v861 = vmin.f32 %v860, %v806
        %v862 = vmin.f32 %v861, %v810
        %v863 = vmin.f32 %v862, %v814
        %v864 = vmin.f32 %v863, %v818
        %v865 = vrot.slane %v864, 4
        %v866 = vmin.f32 %v864, %v865
        %v867 = vrot.slane %v866, 2
        %v868 = vmin.f32 %v866, %v867
        %v869 = vrot.slane %v868, 1
        %v870 = vmin.f32 %v868, %v869
        %v871 = vmax.f32 %v831, 1e-10
        %v872 = vmax.f32 %v844, 1e-10
        %v873 = vmax.f32 %v857, 1e-10
        %v874 = vmax.f32 %v870, 1e-10
        %v875 = vrcp.pop %v871
        %v876 = vmul.f32 1.0, %v875
        %v877 = vrcp.pop %v872
        %v878 = vmul.f32 1.0, %v877
        %v879 = vrcp.pop %v873
        %v880 = vmul.f32 1.0, %v879
        %v881 = vrcp.pop %v874
        %v882 = vmul.f32 1.0, %v881
        %v883 = vmul.f32 %v687, %v876
        %v884 = vmul.f32 %v688, %v878
        %v885 = vmul.f32 %v689, %v880
        %v886 = vmul.f32 %v690, %v882
        %vm887 = vcmp.eq.f32.partialorder %v787, %v831
        %vm888 = vcmp.eq.f32.partialorder %v788, %v844
        %vm889 = vcmp.eq.f32.partialorder %v789, %v857
        %vm890 = vcmp.eq.f32.partialorder %v790, %v870
        %vm891 = vcmp.eq.f32.partialorder %v791, %v831
        %vm892 = vcmp.eq.f32.partialorder %v792, %v844
        %vm893 = vcmp.eq.f32.partialorder %v793, %v857
        %vm894 = vcmp.eq.f32.partialorder %v794, %v870
        %vm895 = vcmp.eq.f32.partialorder %v795, %v831
        %vm896 = vcmp.eq.f32.partialorder %v796, %v844
        %vm897 = vcmp.eq.f32.partialorder %v797, %v857
        %vm898 = vcmp.eq.f32.partialorder %v798, %v870
        %vm899 = vcmp.eq.f32.partialorder %v799, %v831
        %vm900 = vcmp.eq.f32.partialorder %v800, %v844
        %vm901 = vcmp.eq.f32.partialorder %v801, %v857
        %vm902 = vcmp.eq.f32.partialorder %v802, %v870
        %vm903 = vcmp.eq.f32.partialorder %v803, %v831
        %vm904 = vcmp.eq.f32.partialorder %v804, %v844
        %vm905 = vcmp.eq.f32.partialorder %v805, %v857
        %vm906 = vcmp.eq.f32.partialorder %v806, %v870
        %vm907 = vcmp.eq.f32.partialorder %v807, %v831
        %vm908 = vcmp.eq.f32.partialorder %v808, %v844
        %vm909 = vcmp.eq.f32.partialorder %v809, %v857
        %vm910 = vcmp.eq.f32.partialorder %v810, %v870
        %vm911 = vcmp.eq.f32.partialorder %v811, %v831
        %vm912 = vcmp.eq.f32.partialorder %v812, %v844
        %vm913 = vcmp.eq.f32.partialorder %v813, %v857
        %vm914 = vcmp.eq.f32.partialorder %v814, %v870
        %vm915 = vcmp.eq.f32.partialorder %v815, %v831
        %vm916 = vcmp.eq.f32.partialorder %v816, %v844
        %vm917 = vcmp.eq.f32.partialorder %v817, %v857
        %vm918 = vcmp.eq.f32.partialorder %v818, %v870
        %v919 = vsel %vm887, %v883, 0.0
        %v920 = vsel %vm888, %v884, 0.0
        %v921 = vsel %vm889, %v885, 0.0
        %v922 = vsel %vm890, %v886, 0.0
        %v923 = vsel %vm891, %v883, 0.0
        %v924 = vsel %vm892, %v884, 0.0
        %v925 = vsel %vm893, %v885, 0.0
        %v926 = vsel %vm894, %v886, 0.0
        %v927 = vsel %vm895, %v883, 0.0
        %v928 = vsel %vm896, %v884, 0.0
        %v929 = vsel %vm897, %v885, 0.0
        %v930 = vsel %vm898, %v886, 0.0
        %v931 = vsel %vm899, %v883, 0.0
        %v932 = vsel %vm900, %v884, 0.0
        %v933 = vsel %vm901, %v885, 0.0
        %v934 = vsel %vm902, %v886, 0.0
        %v935 = vsel %vm903, %v883, 0.0
        %v936 = vsel %vm904, %v884, 0.0
        %v937 = vsel %vm905, %v885, 0.0
        %v938 = vsel %vm906, %v886, 0.0
        %v939 = vsel %vm907, %v883, 0.0
        %v940 = vsel %vm908, %v884, 0.0
        %v941 = vsel %vm909, %v885, 0.0
        %v942 = vsel %vm910, %v886, 0.0
        %v943 = vsel %vm911, %v883, 0.0
        %v944 = vsel %vm912, %v884, 0.0
        %v945 = vsel %vm913, %v885, 0.0
        %v946 = vsel %vm914, %v886, 0.0
        %v947 = vsel %vm915, %v883, 0.0
        %v948 = vsel %vm916, %v884, 0.0
        %v949 = vsel %vm917, %v885, 0.0
        %v950 = vsel %vm918, %v886, 0.0
        %v951 = vadd.f32 %v755, %v919
        %v952 = vadd.f32 %v756, %v920
        %v953 = vadd.f32 %v757, %v921
        %v954 = vadd.f32 %v758, %v922
        %v955 = vadd.f32 %v759, %v923
        %v956 = vadd.f32 %v760, %v924
        %v957 = vadd.f32 %v761, %v925
        %v958 = vadd.f32 %v762, %v926
        %v959 = vadd.f32 %v763, %v927
        %v960 = vadd.f32 %v764, %v928
        %v961 = vadd.f32 %v765, %v929
        %v962 = vadd.f32 %v766, %v930
        %v963 = vadd.f32 %v767, %v931
        %v964 = vadd.f32 %v768, %v932
        %v965 = vadd.f32 %v769, %v933
        %v966 = vadd.f32 %v770, %v934
        %v967 = vadd.f32 %v771, %v935
        %v968 = vadd.f32 %v772, %v936
        %v969 = vadd.f32 %v773, %v937
        %v970 = vadd.f32 %v774, %v938
        %v971 = vadd.f32 %v775, %v939
        %v972 = vadd.f32 %v776, %v940
        %v973 = vadd.f32 %v777, %v941
        %v974 = vadd.f32 %v778, %v942
        %v975 = vadd.f32 %v779, %v943
        %v976 = vadd.f32 %v780, %v944
        %v977 = vadd.f32 %v781, %v945
        %v978 = vadd.f32 %v782, %v946
        %v979 = vadd.f32 %v783, %v947
        %v980 = vadd.f32 %v784, %v948
        %v981 = vadd.f32 %v785, %v949
        %v982 = vadd.f32 %v786, %v950
        %v983 = vsel %vm887, 1e+30, %v787
        %v984 = vsel %vm888, 1e+30, %v788
        %v985 = vsel %vm889, 1e+30, %v789
        %v986 = vsel %vm890, 1e+30, %v790
        %v987 = vsel %vm891, 1e+30, %v791
        %v988 = vsel %vm892, 1e+30, %v792
        %v989 = vsel %vm893, 1e+30, %v793
        %v990 = vsel %vm894, 1e+30, %v794
        %v991 = vsel %vm895, 1e+30, %v795
        %v992 = vsel %vm896, 1e+30, %v796
        %v993 = vsel %vm897, 1e+30, %v797
        %v994 = vsel %vm898, 1e+30, %v798
        %v995 = vsel %vm899, 1e+30, %v799
        %v996 = vsel %vm900, 1e+30, %v800
        %v997 = vsel %vm901, 1e+30, %v801
        %v998 = vsel %vm902, 1e+30, %v802
        %v999 = vsel %vm903, 1e+30, %v803
        %v1000 = vsel %vm904, 1e+30, %v804
        %v1001 = vsel %vm905, 1e+30, %v805
        %v1002 = vsel %vm906, 1e+30, %v806
        %v1003 = vsel %vm907, 1e+30, %v807
        %v1004 = vsel %vm908, 1e+30, %v808
        %v1005 = vsel %vm909, 1e+30, %v809
        %v1006 = vsel %vm910, 1e+30, %v810
        %v1007 = vsel %vm911, 1e+30, %v811
        %v1008 = vsel %vm912, 1e+30, %v812
        %v1009 = vsel %vm913, 1e+30, %v813
        %v1010 = vsel %vm914, 1e+30, %v814
        %v1011 = vsel %vm915, 1e+30, %v815
        %v1012 = vsel %vm916, 1e+30, %v816
        %v1013 = vsel %vm917, 1e+30, %v817
        %v1014 = vsel %vm918, 1e+30, %v818
        %v1015 = vmin.f32 %v983, %v987
        %v1016 = vmin.f32 %v1015, %v991
        %v1017 = vmin.f32 %v1016, %v995
        %v1018 = vmin.f32 %v1017, %v999
        %v1019 = vmin.f32 %v1018, %v1003
        %v1020 = vmin.f32 %v1019, %v1007
        %v1021 = vmin.f32 %v1020, %v1011
        %v1022 = vrot.slane %v1021, 4
        %v1023 = vmin.f32 %v1021, %v1022
        %v1024 = vrot.slane %v1023, 2
        %v1025 = vmin.f32 %v1023, %v1024
        %v1026 = vrot.slane %v1025, 1
        %v1027 = vmin.f32 %v1025, %v1026
        %v1028 = vmin.f32 %v984, %v988
        %v1029 = vmin.f32 %v1028, %v992
        %v1030 = vmin.f32 %v1029, %v996
        %v1031 = vmin.f32 %v1030, %v1000
        %v1032 = vmin.f32 %v1031, %v1004
        %v1033 = vmin.f32 %v1032, %v1008
        %v1034 = vmin.f32 %v1033, %v1012
        %v1035 = vrot.slane %v1034, 4
        %v1036 = vmin.f32 %v1034, %v1035
        %v1037 = vrot.slane %v1036, 2
        %v1038 = vmin.f32 %v1036, %v1037
        %v1039 = vrot.slane %v1038, 1
        %v1040 = vmin.f32 %v1038, %v1039
        %v1041 = vmin.f32 %v985, %v989
        %v1042 = vmin.f32 %v1041, %v993
        %v1043 = vmin.f32 %v1042, %v997
        %v1044 = vmin.f32 %v1043, %v1001
        %v1045 = vmin.f32 %v1044, %v1005
        %v1046 = vmin.f32 %v1045, %v1009
        %v1047 = vmin.f32 %v1046, %v1013
        %v1048 = vrot.slane %v1047, 4
        %v1049 = vmin.f32 %v1047, %v1048
        %v1050 = vrot.slane %v1049, 2
        %v1051 = vmin.f32 %v1049, %v1050
        %v1052 = vrot.slane %v1051, 1
        %v1053 = vmin.f32 %v1051, %v1052
        %v1054 = vmin.f32 %v986, %v990
        %v1055 = vmin.f32 %v1054, %v994
        %v1056 = vmin.f32 %v1055, %v998
        %v1057 = vmin.f32 %v1056, %v1002
        %v1058 = vmin.f32 %v1057, %v1006
        %v1059 = vmin.f32 %v1058, %v1010
        %v1060 = vmin.f32 %v1059, %v1014
        %v1061 = vrot.slane %v1060, 4
        %v1062 = vmin.f32 %v1060, %v1061
        %v1063 = vrot.slane %v1062, 2
        %v1064 = vmin.f32 %v1062, %v1063
        %v1065 = vrot.slane %v1064, 1
        %v1066 = vmin.f32 %v1064, %v1065
        %v1067 = vmax.f32 %v1027, 1e-10
        %v1068 = vmax.f32 %v1040, 1e-10
        %v1069 = vmax.f32 %v1053, 1e-10
        %v1070 = vmax.f32 %v1066, 1e-10
        %v1071 = vrcp.pop %v1067
        %v1072 = vmul.f32 1.0, %v1071
        %v1073 = vrcp.pop %v1068
        %v1074 = vmul.f32 1.0, %v1073
        %v1075 = vrcp.pop %v1069
        %v1076 = vmul.f32 1.0, %v1075
        %v1077 = vrcp.pop %v1070
        %v1078 = vmul.f32 1.0, %v1077
        %v1079 = vmul.f32 %v687, %v1072
        %v1080 = vmul.f32 %v688, %v1074
        %v1081 = vmul.f32 %v689, %v1076
        %v1082 = vmul.f32 %v690, %v1078
        %vm1083 = vcmp.eq.f32.partialorder %v983, %v1027
        %vm1084 = vcmp.eq.f32.partialorder %v984, %v1040
        %vm1085 = vcmp.eq.f32.partialorder %v985, %v1053
        %vm1086 = vcmp.eq.f32.partialorder %v986, %v1066
        %vm1087 = vcmp.eq.f32.partialorder %v987, %v1027
        %vm1088 = vcmp.eq.f32.partialorder %v988, %v1040
        %vm1089 = vcmp.eq.f32.partialorder %v989, %v1053
        %vm1090 = vcmp.eq.f32.partialorder %v990, %v1066
        %vm1091 = vcmp.eq.f32.partialorder %v991, %v1027
        %vm1092 = vcmp.eq.f32.partialorder %v992, %v1040
        %vm1093 = vcmp.eq.f32.partialorder %v993, %v1053
        %vm1094 = vcmp.eq.f32.partialorder %v994, %v1066
        %vm1095 = vcmp.eq.f32.partialorder %v995, %v1027
        %vm1096 = vcmp.eq.f32.partialorder %v996, %v1040
        %vm1097 = vcmp.eq.f32.partialorder %v997, %v1053
        %vm1098 = vcmp.eq.f32.partialorder %v998, %v1066
        %vm1099 = vcmp.eq.f32.partialorder %v999, %v1027
        %vm1100 = vcmp.eq.f32.partialorder %v1000, %v1040
        %vm1101 = vcmp.eq.f32.partialorder %v1001, %v1053
        %vm1102 = vcmp.eq.f32.partialorder %v1002, %v1066
        %vm1103 = vcmp.eq.f32.partialorder %v1003, %v1027
        %vm1104 = vcmp.eq.f32.partialorder %v1004, %v1040
        %vm1105 = vcmp.eq.f32.partialorder %v1005, %v1053
        %vm1106 = vcmp.eq.f32.partialorder %v1006, %v1066
        %vm1107 = vcmp.eq.f32.partialorder %v1007, %v1027
        %vm1108 = vcmp.eq.f32.partialorder %v1008, %v1040
        %vm1109 = vcmp.eq.f32.partialorder %v1009, %v1053
        %vm1110 = vcmp.eq.f32.partialorder %v1010, %v1066
        %vm1111 = vcmp.eq.f32.partialorder %v1011, %v1027
        %vm1112 = vcmp.eq.f32.partialorder %v1012, %v1040
        %vm1113 = vcmp.eq.f32.partialorder %v1013, %v1053
        %vm1114 = vcmp.eq.f32.partialorder %v1014, %v1066
        %v1115 = vsel %vm1083, %v1079, 0.0
        %v1116 = vsel %vm1084, %v1080, 0.0
        %v1117 = vsel %vm1085, %v1081, 0.0
        %v1118 = vsel %vm1086, %v1082, 0.0
        %v1119 = vsel %vm1087, %v1079, 0.0
        %v1120 = vsel %vm1088, %v1080, 0.0
        %v1121 = vsel %vm1089, %v1081, 0.0
        %v1122 = vsel %vm1090, %v1082, 0.0
        %v1123 = vsel %vm1091, %v1079, 0.0
        %v1124 = vsel %vm1092, %v1080, 0.0
        %v1125 = vsel %vm1093, %v1081, 0.0
        %v1126 = vsel %vm1094, %v1082, 0.0
        %v1127 = vsel %vm1095, %v1079, 0.0
        %v1128 = vsel %vm1096, %v1080, 0.0
        %v1129 = vsel %vm1097, %v1081, 0.0
        %v1130 = vsel %vm1098, %v1082, 0.0
        %v1131 = vsel %vm1099, %v1079, 0.0
        %v1132 = vsel %vm1100, %v1080, 0.0
        %v1133 = vsel %vm1101, %v1081, 0.0
        %v1134 = vsel %vm1102, %v1082, 0.0
        %v1135 = vsel %vm1103, %v1079, 0.0
        %v1136 = vsel %vm1104, %v1080, 0.0
        %v1137 = vsel %vm1105, %v1081, 0.0
        %v1138 = vsel %vm1106, %v1082, 0.0
        %v1139 = vsel %vm1107, %v1079, 0.0
        %v1140 = vsel %vm1108, %v1080, 0.0
        %v1141 = vsel %vm1109, %v1081, 0.0
        %v1142 = vsel %vm1110, %v1082, 0.0
        %v1143 = vsel %vm1111, %v1079, 0.0
        %v1144 = vsel %vm1112, %v1080, 0.0
        %v1145 = vsel %vm1113, %v1081, 0.0
        %v1146 = vsel %vm1114, %v1082, 0.0
        %v1147 = vadd.f32 %v951, %v1115
        %v1148 = vadd.f32 %v952, %v1116
        %v1149 = vadd.f32 %v953, %v1117
        %v1150 = vadd.f32 %v954, %v1118
        %v1151 = vadd.f32 %v955, %v1119
        %v1152 = vadd.f32 %v956, %v1120
        %v1153 = vadd.f32 %v957, %v1121
        %v1154 = vadd.f32 %v958, %v1122
        %v1155 = vadd.f32 %v959, %v1123
        %v1156 = vadd.f32 %v960, %v1124
        %v1157 = vadd.f32 %v961, %v1125
        %v1158 = vadd.f32 %v962, %v1126
        %v1159 = vadd.f32 %v963, %v1127
        %v1160 = vadd.f32 %v964, %v1128
        %v1161 = vadd.f32 %v965, %v1129
        %v1162 = vadd.f32 %v966, %v1130
        %v1163 = vadd.f32 %v967, %v1131
        %v1164 = vadd.f32 %v968, %v1132
        %v1165 = vadd.f32 %v969, %v1133
        %v1166 = vadd.f32 %v970, %v1134
        %v1167 = vadd.f32 %v971, %v1135
        %v1168 = vadd.f32 %v972, %v1136
        %v1169 = vadd.f32 %v973, %v1137
        %v1170 = vadd.f32 %v974, %v1138
        %v1171 = vadd.f32 %v975, %v1139
        %v1172 = vadd.f32 %v976, %v1140
        %v1173 = vadd.f32 %v977, %v1141
        %v1174 = vadd.f32 %v978, %v1142
        %v1175 = vadd.f32 %v979, %v1143
        %v1176 = vadd.f32 %v980, %v1144
        %v1177 = vadd.f32 %v981, %v1145
        %v1178 = vadd.f32 %v982, %v1146
        %v1179 = vadd.f32 %v1147, %v1151
        %v1180 = vadd.f32 %v1179, %v1155
        %v1181 = vadd.f32 %v1180, %v1159
        %v1182 = vadd.f32 %v1181, %v1163
        %v1183 = vadd.f32 %v1182, %v1167
        %v1184 = vadd.f32 %v1183, %v1171
        %v1185 = vadd.f32 %v1184, %v1175
        %v1186 = vrot.slane %v1185, 4
        %v1187 = vadd.f32 %v1185, %v1186
        %v1188 = vrot.slane %v1187, 2
        %v1189 = vadd.f32 %v1187, %v1188
        %v1190 = vrot.slane %v1189, 1
        %v1191 = vadd.f32 %v1189, %v1190
        %v1192 = vadd.f32 %v1148, %v1152
        %v1193 = vadd.f32 %v1192, %v1156
        %v1194 = vadd.f32 %v1193, %v1160
        %v1195 = vadd.f32 %v1194, %v1164
        %v1196 = vadd.f32 %v1195, %v1168
        %v1197 = vadd.f32 %v1196, %v1172
        %v1198 = vadd.f32 %v1197, %v1176
        %v1199 = vrot.slane %v1198, 4
        %v1200 = vadd.f32 %v1198, %v1199
        %v1201 = vrot.slane %v1200, 2
        %v1202 = vadd.f32 %v1200, %v1201
        %v1203 = vrot.slane %v1202, 1
        %v1204 = vadd.f32 %v1202, %v1203
        %v1205 = vadd.f32 %v1149, %v1153
        %v1206 = vadd.f32 %v1205, %v1157
        %v1207 = vadd.f32 %v1206, %v1161
        %v1208 = vadd.f32 %v1207, %v1165
        %v1209 = vadd.f32 %v1208, %v1169
        %v1210 = vadd.f32 %v1209, %v1173
        %v1211 = vadd.f32 %v1210, %v1177
        %v1212 = vrot.slane %v1211, 4
        %v1213 = vadd.f32 %v1211, %v1212
        %v1214 = vrot.slane %v1213, 2
        %v1215 = vadd.f32 %v1213, %v1214
        %v1216 = vrot.slane %v1215, 1
        %v1217 = vadd.f32 %v1215, %v1216
        %v1218 = vadd.f32 %v1150, %v1154
        %v1219 = vadd.f32 %v1218, %v1158
        %v1220 = vadd.f32 %v1219, %v1162
        %v1221 = vadd.f32 %v1220, %v1166
        %v1222 = vadd.f32 %v1221, %v1170
        %v1223 = vadd.f32 %v1222, %v1174
        %v1224 = vadd.f32 %v1223, %v1178
        %v1225 = vrot.slane %v1224, 4
        %v1226 = vadd.f32 %v1224, %v1225
        %v1227 = vrot.slane %v1226, 2
        %v1228 = vadd.f32 %v1226, %v1227
        %v1229 = vrot.slane %v1228, 1
        %v1230 = vadd.f32 %v1228, %v1229
        %v1231 = vrcp.pop %v1191
        %v1232 = vmul.f32 1.0, %v1231
        %v1233 = vrcp.pop %v1204
        %v1234 = vmul.f32 1.0, %v1233
        %v1235 = vrcp.pop %v1217
        %v1236 = vmul.f32 1.0, %v1235
        %v1237 = vrcp.pop %v1230
        %v1238 = vmul.f32 1.0, %v1237
        %v1239 = vld [vmem:[%s409] sm:$0xff]
        %v1240 = vld [vmem:[%s409 + $0x8] sm:$0xff]
        %v1241 = vld [vmem:[%s409 + $0x10] sm:$0xff]
        %v1242 = vld [vmem:[%s409 + $0x18] sm:$0xff]
        %v1243 = vld [vmem:[%s409 + $0x20] sm:$0xff]
        %v1244 = vld [vmem:[%s409 + $0x28] sm:$0xff]
        %v1245 = vld [vmem:[%s409 + $0x30] sm:$0xff]
        %v1246 = vld [vmem:[%s409 + $0x38] sm:$0xff]
        %vm1247 = vcmask 523264
        %v1249 = vsel %vm1247, %v1239, 0
        %v1252 = vsel %vm1247, %v1240, 0
        %v1255 = vsel %vm1247, %v1241, 0
        %v1258 = vsel %vm1247, %v1242, 0
        %v1261 = vsel %vm1247, %v1243, 0
        %v1264 = vsel %vm1247, %v1244, 0
        %v1267 = vsel %vm1247, %v1245, 0
        %v1270 = vsel %vm1247, %v1246, 0
        %1272 = vmatprep.subr.mxu0 0.0
        %1273 = vmatpush1.msra.mxu0 0.0
        %1274 = vmatprep.subr.mxu0 0.0
        %1275 = vmatpush1.msra.mxu0 0.0
        %1276 = vmatprep.subr.mxu0 0.0
        %1277 = vmatpush1.msra.mxu0 0.0
        %1278 = vmatprep.subr.mxu0 0.0
        %1279 = vmatpush1.msra.mxu0 0.0
        %1280 = vmatprep.subr.mxu0 0.0
        %1281 = vmatpush1.msra.mxu0 0.0
        %1282 = vmatprep.subr.mxu0 0.0
        %1283 = vmatpush1.msra.mxu0 0.0
        %1284 = vmatprep.subr.mxu0 0.0
        %1285 = vmatpush1.msra.mxu0 0.0
        %1286 = vmatprep.subr.mxu0 0.0
        %1287 = vmatpush1.msra.mxu0 0.0
        %1288 = vmatprep.subr.mxu0 %v1176
        %1289 = vmatpush1.msra.mxu0 %v1175
        %1290 = vmatprep.subr.mxu0 %v1172
        %1291 = vmatpush1.msra.mxu0 %v1171
        %1292 = vmatprep.subr.mxu0 %v1168
        %1293 = vmatpush1.msra.mxu0 %v1167
        %1294 = vmatprep.subr.mxu0 %v1164
        %1295 = vmatpush1.msra.mxu0 %v1163
        %1296 = vmatprep.subr.mxu0 %v1160
        %1297 = vmatpush1.msra.mxu0 %v1159
        %1298 = vmatprep.subr.mxu0 %v1156
        %1299 = vmatpush1.msra.mxu0 %v1155
        %1300 = vmatprep.subr.mxu0 %v1152
        %1301 = vmatpush1.msra.mxu0 %v1151
        %1302 = vmatprep.subr.mxu0 %v1148
        %1303 = vmatpush1.msra.mxu0 %v1147
        %1304 = vmatprep.subr.mxu0 0.0
        %1305 = vmatpush2.msra.mxu0 0.0
        %1306 = vmatprep.subr.mxu0 0.0
        %1307 = vmatpush2.msra.mxu0 0.0
        %1308 = vmatprep.subr.mxu0 0.0
        %1309 = vmatpush2.msra.mxu0 0.0
        %1310 = vmatprep.subr.mxu0 0.0
        %1311 = vmatpush2.msra.mxu0 0.0
        %1312 = vmatprep.subr.mxu0 0.0
        %1313 = vmatpush2.msra.mxu0 0.0
        %1314 = vmatprep.subr.mxu0 0.0
        %1315 = vmatpush2.msra.mxu0 0.0
        %1316 = vmatprep.subr.mxu0 0.0
        %1317 = vmatpush2.msra.mxu0 0.0
        %1318 = vmatprep.subr.mxu0 0.0
        %1319 = vmatpush2.msra.mxu0 0.0
        %1320 = vmatprep.subr.mxu0 0.0
        %1321 = vmatpush2.msra.mxu0 0.0
        %1322 = vmatprep.subr.mxu0 0.0
        %1323 = vmatpush2.msra.mxu0 0.0
        %1324 = vmatprep.subr.mxu0 0.0
        %1325 = vmatpush2.msra.mxu0 0.0
        %1326 = vmatprep.subr.mxu0 0.0
        %1327 = vmatpush2.msra.mxu0 0.0
        %1328 = vmatprep.subr.mxu0 0.0
        %1329 = vmatpush2.msra.mxu0 0.0
        %1330 = vmatprep.subr.mxu0 0.0
        %1331 = vmatpush2.msra.mxu0 0.0
        %1332 = vmatprep.subr.mxu0 0.0
        %1333 = vmatpush2.msra.mxu0 0.0
        %1334 = vmatprep.subr.mxu0 0.0
        %1335 = vmatpush2.msra.mxu0 0.0
        %1336 = vmatprep.mubr.f32.mxu0 0.0
        %1337 = vmatmul.mubr.f32.gmra.mxu0 %v1249
        %v1338 = vpop.f32.mrf.mxu0
        %v1339 = vadd.f32 0.0, %v1338
        %v1340 = vpop.f32.mrf.mxu0
        %v1341 = vadd.f32 0.0, %v1340
        %1342 = vmatprep.mubr.f32.mxu0 0.0
        %1343 = vmatmul.mubr.f32.gmra.mxu0 %v1252
        %v1344 = vpop.f32.mrf.mxu0
        %v1345 = vadd.f32 0.0, %v1344
        %v1346 = vpop.f32.mrf.mxu0
        %v1347 = vadd.f32 0.0, %v1346
        %1348 = vmatprep.mubr.f32.mxu0 0.0
        %1349 = vmatmul.mubr.f32.gmra.mxu0 %v1255
        %v1350 = vpop.f32.mrf.mxu0
        %v1351 = vadd.f32 0.0, %v1350
        %v1352 = vpop.f32.mrf.mxu0
        %v1353 = vadd.f32 0.0, %v1352
        %1354 = vmatprep.mubr.f32.mxu0 0.0
        %1355 = vmatmul.mubr.f32.gmra.mxu0 %v1258
        %v1356 = vpop.f32.mrf.mxu0
        %v1357 = vadd.f32 0.0, %v1356
        %v1358 = vpop.f32.mrf.mxu0
        %v1359 = vadd.f32 0.0, %v1358
        %1360 = vmatprep.mubr.f32.mxu0 0.0
        %1361 = vmatmul.mubr.f32.gmra.mxu0 %v1261
        %v1362 = vpop.f32.mrf.mxu0
        %v1363 = vadd.f32 0.0, %v1362
        %v1364 = vpop.f32.mrf.mxu0
        %v1365 = vadd.f32 0.0, %v1364
        %1366 = vmatprep.mubr.f32.mxu0 0.0
        %1367 = vmatmul.mubr.f32.gmra.mxu0 %v1264
        %v1368 = vpop.f32.mrf.mxu0
        %v1369 = vadd.f32 0.0, %v1368
        %v1370 = vpop.f32.mrf.mxu0
        %v1371 = vadd.f32 0.0, %v1370
        %1372 = vmatprep.mubr.f32.mxu0 0.0
        %1373 = vmatmul.mubr.f32.gmra.mxu0 %v1267
        %v1374 = vpop.f32.mrf.mxu0
        %v1375 = vadd.f32 0.0, %v1374
        %v1376 = vpop.f32.mrf.mxu0
        %v1377 = vadd.f32 0.0, %v1376
        %1378 = vmatprep.mubr.f32.mxu0 0.0
        %1379 = vmatmul.mubr.f32.gmra.mxu0 %v1270
        %v1380 = vpop.f32.mrf.mxu0
        %v1381 = vadd.f32 0.0, %v1380
        %v1382 = vpop.f32.mrf.mxu0
        %v1383 = vadd.f32 0.0, %v1382
        %1384 = vdwg.mxu0
        %1385 = vmatprep.subr.mxu0 0.0
        %1386 = vmatpush1.msra.mxu0 0.0
        %1387 = vmatprep.subr.mxu0 0.0
        %1388 = vmatpush1.msra.mxu0 0.0
        %1389 = vmatprep.subr.mxu0 0.0
        %1390 = vmatpush1.msra.mxu0 0.0
        %1391 = vmatprep.subr.mxu0 0.0
        %1392 = vmatpush1.msra.mxu0 0.0
        %1393 = vmatprep.subr.mxu0 0.0
        %1394 = vmatpush1.msra.mxu0 0.0
        %1395 = vmatprep.subr.mxu0 0.0
        %1396 = vmatpush1.msra.mxu0 0.0
        %1397 = vmatprep.subr.mxu0 0.0
        %1398 = vmatpush1.msra.mxu0 0.0
        %1399 = vmatprep.subr.mxu0 0.0
        %1400 = vmatpush1.msra.mxu0 0.0
        %1401 = vmatprep.subr.mxu0 %v1178
        %1402 = vmatpush1.msra.mxu0 %v1177
        %1403 = vmatprep.subr.mxu0 %v1174
        %1404 = vmatpush1.msra.mxu0 %v1173
        %1405 = vmatprep.subr.mxu0 %v1170
        %1406 = vmatpush1.msra.mxu0 %v1169
        %1407 = vmatprep.subr.mxu0 %v1166
        %1408 = vmatpush1.msra.mxu0 %v1165
        %1409 = vmatprep.subr.mxu0 %v1162
        %1410 = vmatpush1.msra.mxu0 %v1161
        %1411 = vmatprep.subr.mxu0 %v1158
        %1412 = vmatpush1.msra.mxu0 %v1157
        %1413 = vmatprep.subr.mxu0 %v1154
        %1414 = vmatpush1.msra.mxu0 %v1153
        %1415 = vmatprep.subr.mxu0 %v1150
        %1416 = vmatpush1.msra.mxu0 %v1149
        %1417 = vmatprep.subr.mxu0 0.0
        %1418 = vmatpush2.msra.mxu0 0.0
        %1419 = vmatprep.subr.mxu0 0.0
        %1420 = vmatpush2.msra.mxu0 0.0
        %1421 = vmatprep.subr.mxu0 0.0
        %1422 = vmatpush2.msra.mxu0 0.0
        %1423 = vmatprep.subr.mxu0 0.0
        %1424 = vmatpush2.msra.mxu0 0.0
        %1425 = vmatprep.subr.mxu0 0.0
        %1426 = vmatpush2.msra.mxu0 0.0
        %1427 = vmatprep.subr.mxu0 0.0
        %1428 = vmatpush2.msra.mxu0 0.0
        %1429 = vmatprep.subr.mxu0 0.0
        %1430 = vmatpush2.msra.mxu0 0.0
        %1431 = vmatprep.subr.mxu0 0.0
        %1432 = vmatpush2.msra.mxu0 0.0
        %1433 = vmatprep.subr.mxu0 0.0
        %1434 = vmatpush2.msra.mxu0 0.0
        %1435 = vmatprep.subr.mxu0 0.0
        %1436 = vmatpush2.msra.mxu0 0.0
        %1437 = vmatprep.subr.mxu0 0.0
        %1438 = vmatpush2.msra.mxu0 0.0
        %1439 = vmatprep.subr.mxu0 0.0
        %1440 = vmatpush2.msra.mxu0 0.0
        %1441 = vmatprep.subr.mxu0 0.0
        %1442 = vmatpush2.msra.mxu0 0.0
        %1443 = vmatprep.subr.mxu0 0.0
        %1444 = vmatpush2.msra.mxu0 0.0
        %1445 = vmatprep.subr.mxu0 0.0
        %1446 = vmatpush2.msra.mxu0 0.0
        %1447 = vmatprep.subr.mxu0 0.0
        %1448 = vmatpush2.msra.mxu0 0.0
        %1449 = vmatprep.mubr.f32.mxu0 0.0
        %1450 = vmatmul.mubr.f32.gmra.mxu0 %v1249
        %v1451 = vpop.f32.mrf.mxu0
        %v1452 = vadd.f32 0.0, %v1451
        %v1453 = vpop.f32.mrf.mxu0
        %v1454 = vadd.f32 0.0, %v1453
        %1455 = vmatprep.mubr.f32.mxu0 0.0
        %1456 = vmatmul.mubr.f32.gmra.mxu0 %v1252
        %v1457 = vpop.f32.mrf.mxu0
        %v1458 = vadd.f32 0.0, %v1457
        %v1459 = vpop.f32.mrf.mxu0
        %v1460 = vadd.f32 0.0, %v1459
        %1461 = vmatprep.mubr.f32.mxu0 0.0
        %1462 = vmatmul.mubr.f32.gmra.mxu0 %v1255
        %v1463 = vpop.f32.mrf.mxu0
        %v1464 = vadd.f32 0.0, %v1463
        %v1465 = vpop.f32.mrf.mxu0
        %v1466 = vadd.f32 0.0, %v1465
        %1467 = vmatprep.mubr.f32.mxu0 0.0
        %1468 = vmatmul.mubr.f32.gmra.mxu0 %v1258
        %v1469 = vpop.f32.mrf.mxu0
        %v1470 = vadd.f32 0.0, %v1469
        %v1471 = vpop.f32.mrf.mxu0
        %v1472 = vadd.f32 0.0, %v1471
        %1473 = vmatprep.mubr.f32.mxu0 0.0
        %1474 = vmatmul.mubr.f32.gmra.mxu0 %v1261
        %v1475 = vpop.f32.mrf.mxu0
        %v1476 = vadd.f32 0.0, %v1475
        %v1477 = vpop.f32.mrf.mxu0
        %v1478 = vadd.f32 0.0, %v1477
        %1479 = vmatprep.mubr.f32.mxu0 0.0
        %1480 = vmatmul.mubr.f32.gmra.mxu0 %v1264
        %v1481 = vpop.f32.mrf.mxu0
        %v1482 = vadd.f32 0.0, %v1481
        %v1483 = vpop.f32.mrf.mxu0
        %v1484 = vadd.f32 0.0, %v1483
        %1485 = vmatprep.mubr.f32.mxu0 0.0
        %1486 = vmatmul.mubr.f32.gmra.mxu0 %v1267
        %v1487 = vpop.f32.mrf.mxu0
        %v1488 = vadd.f32 0.0, %v1487
        %v1489 = vpop.f32.mrf.mxu0
        %v1490 = vadd.f32 0.0, %v1489
        %1491 = vmatprep.mubr.f32.mxu0 0.0
        %1492 = vmatmul.mubr.f32.gmra.mxu0 %v1270
        %v1493 = vpop.f32.mrf.mxu0
        %v1494 = vadd.f32 0.0, %v1493
        %v1495 = vpop.f32.mrf.mxu0
        %v1496 = vadd.f32 0.0, %v1495
        %1497 = vdwg.mxu0
        %v1498 = vmul.f32 %v1339, %v1232
        %v1499 = vmul.f32 %v1341, %v1234
        %v1500 = vmul.f32 %v1452, %v1236
        %v1501 = vmul.f32 %v1454, %v1238
        %v1502 = vmul.f32 %v1345, %v1232
        %v1503 = vmul.f32 %v1347, %v1234
        %v1504 = vmul.f32 %v1458, %v1236
        %v1505 = vmul.f32 %v1460, %v1238
        %v1506 = vmul.f32 %v1351, %v1232
        %v1507 = vmul.f32 %v1353, %v1234
        %v1508 = vmul.f32 %v1464, %v1236
        %v1509 = vmul.f32 %v1466, %v1238
        %v1510 = vmul.f32 %v1357, %v1232
        %v1511 = vmul.f32 %v1359, %v1234
        %v1512 = vmul.f32 %v1470, %v1236
        %v1513 = vmul.f32 %v1472, %v1238
        %v1514 = vmul.f32 %v1363, %v1232
        %v1515 = vmul.f32 %v1365, %v1234
        %v1516 = vmul.f32 %v1476, %v1236
        %v1517 = vmul.f32 %v1478, %v1238
        %v1518 = vmul.f32 %v1369, %v1232
        %v1519 = vmul.f32 %v1371, %v1234
        %v1520 = vmul.f32 %v1482, %v1236
        %v1521 = vmul.f32 %v1484, %v1238
        %v1522 = vmul.f32 %v1375, %v1232
        %v1523 = vmul.f32 %v1377, %v1234
        %v1524 = vmul.f32 %v1488, %v1236
        %v1525 = vmul.f32 %v1490, %v1238
        %v1526 = vmul.f32 %v1381, %v1232
        %v1527 = vmul.f32 %v1383, %v1234
        %v1528 = vmul.f32 %v1494, %v1236
        %v1529 = vmul.f32 %v1496, %v1238
        %v1530 = vld [vmem:[%s4] sm:$0xff]
        %v1531 = vld [vmem:[%s4 + $0x8] sm:$0xff]
        %v1532 = vld [vmem:[%s4 + $0x10] sm:$0xff]
        %v1533 = vld [vmem:[%s4 + $0x18] sm:$0xff]
        %v1534 = vld [vmem:[%s4 + $0x20] sm:$0xff]
        %v1535 = vld [vmem:[%s4 + $0x28] sm:$0xff]
        %v1536 = vld [vmem:[%s4 + $0x30] sm:$0xff]
        %v1537 = vld [vmem:[%s4 + $0x38] sm:$0xff]
        %v1538 = vld [vmem:[%s403] sm:$0xff]
        %v1539 = vld [vmem:[%s403 + $0x8] sm:$0xff]
        %v1540 = vld [vmem:[%s403 + $0x10] sm:$0xff]
        %v1541 = vld [vmem:[%s403 + $0x18] sm:$0xff]
        %v1542 = vld [vmem:[%s403 + $0x20] sm:$0xff]
        %v1543 = vld [vmem:[%s403 + $0x28] sm:$0xff]
        %v1544 = vld [vmem:[%s403 + $0x30] sm:$0xff]
        %v1545 = vld [vmem:[%s403 + $0x38] sm:$0xff]
        %vm1546 = vcmask 130048
        %v1548 = vsel %vm1546, %v1530, 0
        %v1551 = vsel %vm1546, %v1531, 0
        %v1554 = vsel %vm1546, %v1532, 0
        %v1557 = vsel %vm1546, %v1533, 0
        %v1560 = vsel %vm1546, %v1534, 0
        %v1563 = vsel %vm1546, %v1535, 0
        %v1566 = vsel %vm1546, %v1536, 0
        %v1569 = vsel %vm1546, %v1537, 0
        %1571 = vmatprep.subr.mxu0 0.0
        %1572 = vmatpush1.msra.mxu0 0.0
        %1573 = vmatprep.subr.mxu0 0.0
        %1574 = vmatpush1.msra.mxu0 0.0
        %1575 = vmatprep.subr.mxu0 0.0
        %1576 = vmatpush1.msra.mxu0 0.0
        %1577 = vmatprep.subr.mxu0 0.0
        %1578 = vmatpush1.msra.mxu0 0.0
        %1579 = vmatprep.subr.mxu0 0.0
        %1580 = vmatpush1.msra.mxu0 0.0
        %1581 = vmatprep.subr.mxu0 0.0
        %1582 = vmatpush1.msra.mxu0 0.0
        %1583 = vmatprep.subr.mxu0 0.0
        %1584 = vmatpush1.msra.mxu0 0.0
        %1585 = vmatprep.subr.mxu0 0.0
        %1586 = vmatpush1.msra.mxu0 0.0
        %1587 = vmatprep.subr.mxu0 0.0
        %1588 = vmatpush1.msra.mxu0 0.0
        %1589 = vmatprep.subr.mxu0 0.0
        %1590 = vmatpush1.msra.mxu0 0.0
        %1591 = vmatprep.subr.mxu0 0.0
        %1592 = vmatpush1.msra.mxu0 0.0
        %1593 = vmatprep.subr.mxu0 0.0
        %1594 = vmatpush1.msra.mxu0 0.0
        %1595 = vmatprep.subr.mxu0 0.0
        %1596 = vmatpush1.msra.mxu0 0.0
        %1597 = vmatprep.subr.mxu0 0.0
        %1598 = vmatpush1.msra.mxu0 0.0
        %1599 = vmatprep.subr.mxu0 %v1543
        %1600 = vmatpush1.msra.mxu0 %v1542
        %1601 = vmatprep.subr.mxu0 %v1539
        %1602 = vmatpush1.msra.mxu0 %v1538
        %1603 = vmatprep.subr.mxu0 0.0
        %1604 = vmatpush2.msra.mxu0 0.0
        %1605 = vmatprep.subr.mxu0 0.0
        %1606 = vmatpush2.msra.mxu0 0.0
        %1607 = vmatprep.subr.mxu0 0.0
        %1608 = vmatpush2.msra.mxu0 0.0
        %1609 = vmatprep.subr.mxu0 0.0
        %1610 = vmatpush2.msra.mxu0 0.0
        %1611 = vmatprep.subr.mxu0 0.0
        %1612 = vmatpush2.msra.mxu0 0.0
        %1613 = vmatprep.subr.mxu0 0.0
        %1614 = vmatpush2.msra.mxu0 0.0
        %1615 = vmatprep.subr.mxu0 0.0
        %1616 = vmatpush2.msra.mxu0 0.0
        %1617 = vmatprep.subr.mxu0 0.0
        %1618 = vmatpush2.msra.mxu0 0.0
        %1619 = vmatprep.subr.mxu0 0.0
        %1620 = vmatpush2.msra.mxu0 0.0
        %1621 = vmatprep.subr.mxu0 0.0
        %1622 = vmatpush2.msra.mxu0 0.0
        %1623 = vmatprep.subr.mxu0 0.0
        %1624 = vmatpush2.msra.mxu0 0.0
        %1625 = vmatprep.subr.mxu0 0.0
        %1626 = vmatpush2.msra.mxu0 0.0
        %1627 = vmatprep.subr.mxu0 0.0
        %1628 = vmatpush2.msra.mxu0 0.0
        %1629 = vmatprep.subr.mxu0 0.0
        %1630 = vmatpush2.msra.mxu0 0.0
        %1631 = vmatprep.subr.mxu0 0.0
        %1632 = vmatpush2.msra.mxu0 0.0
        %1633 = vmatprep.subr.mxu0 0.0
        %1634 = vmatpush2.msra.mxu0 0.0
        %1635 = vmatprep.mubr.f32.mxu0 0.0
        %1636 = vmatmul.mubr.f32.gmra.mxu0 %v1548
        %v1637 = vpop.f32.mrf.mxu0
        %v1638 = vadd.f32 0.0, %v1637
        %v1639 = vpop.f32.mrf.mxu0
        %v1640 = vadd.f32 0.0, %v1639
        %1641 = vmatprep.mubr.f32.mxu0 0.0
        %1642 = vmatmul.mubr.f32.gmra.mxu0 %v1551
        %v1643 = vpop.f32.mrf.mxu0
        %v1644 = vadd.f32 0.0, %v1643
        %v1645 = vpop.f32.mrf.mxu0
        %v1646 = vadd.f32 0.0, %v1645
        %1647 = vmatprep.mubr.f32.mxu0 0.0
        %1648 = vmatmul.mubr.f32.gmra.mxu0 %v1554
        %v1649 = vpop.f32.mrf.mxu0
        %v1650 = vadd.f32 0.0, %v1649
        %v1651 = vpop.f32.mrf.mxu0
        %v1652 = vadd.f32 0.0, %v1651
        %1653 = vmatprep.mubr.f32.mxu0 0.0
        %1654 = vmatmul.mubr.f32.gmra.mxu0 %v1557
        %v1655 = vpop.f32.mrf.mxu0
        %v1656 = vadd.f32 0.0, %v1655
        %v1657 = vpop.f32.mrf.mxu0
        %v1658 = vadd.f32 0.0, %v1657
        %1659 = vmatprep.mubr.f32.mxu0 0.0
        %1660 = vmatmul.mubr.f32.gmra.mxu0 %v1560
        %v1661 = vpop.f32.mrf.mxu0
        %v1662 = vadd.f32 0.0, %v1661
        %v1663 = vpop.f32.mrf.mxu0
        %v1664 = vadd.f32 0.0, %v1663
        %1665 = vmatprep.mubr.f32.mxu0 0.0
        %1666 = vmatmul.mubr.f32.gmra.mxu0 %v1563
        %v1667 = vpop.f32.mrf.mxu0
        %v1668 = vadd.f32 0.0, %v1667
        %v1669 = vpop.f32.mrf.mxu0
        %v1670 = vadd.f32 0.0, %v1669
        %1671 = vmatprep.mubr.f32.mxu0 0.0
        %1672 = vmatmul.mubr.f32.gmra.mxu0 %v1566
        %v1673 = vpop.f32.mrf.mxu0
        %v1674 = vadd.f32 0.0, %v1673
        %v1675 = vpop.f32.mrf.mxu0
        %v1676 = vadd.f32 0.0, %v1675
        %1677 = vmatprep.mubr.f32.mxu0 0.0
        %1678 = vmatmul.mubr.f32.gmra.mxu0 %v1569
        %v1679 = vpop.f32.mrf.mxu0
        %v1680 = vadd.f32 0.0, %v1679
        %v1681 = vpop.f32.mrf.mxu0
        %v1682 = vadd.f32 0.0, %v1681
        %1683 = vdwg.mxu0
        %1684 = vmatprep.subr.mxu0 0.0
        %1685 = vmatpush1.msra.mxu0 0.0
        %1686 = vmatprep.subr.mxu0 0.0
        %1687 = vmatpush1.msra.mxu0 0.0
        %1688 = vmatprep.subr.mxu0 0.0
        %1689 = vmatpush1.msra.mxu0 0.0
        %1690 = vmatprep.subr.mxu0 0.0
        %1691 = vmatpush1.msra.mxu0 0.0
        %1692 = vmatprep.subr.mxu0 0.0
        %1693 = vmatpush1.msra.mxu0 0.0
        %1694 = vmatprep.subr.mxu0 0.0
        %1695 = vmatpush1.msra.mxu0 0.0
        %1696 = vmatprep.subr.mxu0 0.0
        %1697 = vmatpush1.msra.mxu0 0.0
        %1698 = vmatprep.subr.mxu0 0.0
        %1699 = vmatpush1.msra.mxu0 0.0
        %1700 = vmatprep.subr.mxu0 0.0
        %1701 = vmatpush1.msra.mxu0 0.0
        %1702 = vmatprep.subr.mxu0 0.0
        %1703 = vmatpush1.msra.mxu0 0.0
        %1704 = vmatprep.subr.mxu0 0.0
        %1705 = vmatpush1.msra.mxu0 0.0
        %1706 = vmatprep.subr.mxu0 0.0
        %1707 = vmatpush1.msra.mxu0 0.0
        %1708 = vmatprep.subr.mxu0 0.0
        %1709 = vmatpush1.msra.mxu0 0.0
        %1710 = vmatprep.subr.mxu0 0.0
        %1711 = vmatpush1.msra.mxu0 0.0
        %1712 = vmatprep.subr.mxu0 %v1545
        %1713 = vmatpush1.msra.mxu0 %v1544
        %1714 = vmatprep.subr.mxu0 %v1541
        %1715 = vmatpush1.msra.mxu0 %v1540
        %1716 = vmatprep.subr.mxu0 0.0
        %1717 = vmatpush2.msra.mxu0 0.0
        %1718 = vmatprep.subr.mxu0 0.0
        %1719 = vmatpush2.msra.mxu0 0.0
        %1720 = vmatprep.subr.mxu0 0.0
        %1721 = vmatpush2.msra.mxu0 0.0
        %1722 = vmatprep.subr.mxu0 0.0
        %1723 = vmatpush2.msra.mxu0 0.0
        %1724 = vmatprep.subr.mxu0 0.0
        %1725 = vmatpush2.msra.mxu0 0.0
        %1726 = vmatprep.subr.mxu0 0.0
        %1727 = vmatpush2.msra.mxu0 0.0
        %1728 = vmatprep.subr.mxu0 0.0
        %1729 = vmatpush2.msra.mxu0 0.0
        %1730 = vmatprep.subr.mxu0 0.0
        %1731 = vmatpush2.msra.mxu0 0.0
        %1732 = vmatprep.subr.mxu0 0.0
        %1733 = vmatpush2.msra.mxu0 0.0
        %1734 = vmatprep.subr.mxu0 0.0
        %1735 = vmatpush2.msra.mxu0 0.0
        %1736 = vmatprep.subr.mxu0 0.0
        %1737 = vmatpush2.msra.mxu0 0.0
        %1738 = vmatprep.subr.mxu0 0.0
        %1739 = vmatpush2.msra.mxu0 0.0
        %1740 = vmatprep.subr.mxu0 0.0
        %1741 = vmatpush2.msra.mxu0 0.0
        %1742 = vmatprep.subr.mxu0 0.0
        %1743 = vmatpush2.msra.mxu0 0.0
        %1744 = vmatprep.subr.mxu0 0.0
        %1745 = vmatpush2.msra.mxu0 0.0
        %1746 = vmatprep.subr.mxu0 0.0
        %1747 = vmatpush2.msra.mxu0 0.0
        %1748 = vmatprep.mubr.f32.mxu0 0.0
        %1749 = vmatmul.mubr.f32.gmra.mxu0 %v1548
        %v1750 = vpop.f32.mrf.mxu0
        %v1751 = vadd.f32 0.0, %v1750
        %v1752 = vpop.f32.mrf.mxu0
        %v1753 = vadd.f32 0.0, %v1752
        %1754 = vmatprep.mubr.f32.mxu0 0.0
        %1755 = vmatmul.mubr.f32.gmra.mxu0 %v1551
        %v1756 = vpop.f32.mrf.mxu0
        %v1757 = vadd.f32 0.0, %v1756
        %v1758 = vpop.f32.mrf.mxu0
        %v1759 = vadd.f32 0.0, %v1758
        %1760 = vmatprep.mubr.f32.mxu0 0.0
        %1761 = vmatmul.mubr.f32.gmra.mxu0 %v1554
        %v1762 = vpop.f32.mrf.mxu0
        %v1763 = vadd.f32 0.0, %v1762
        %v1764 = vpop.f32.mrf.mxu0
        %v1765 = vadd.f32 0.0, %v1764
        %1766 = vmatprep.mubr.f32.mxu0 0.0
        %1767 = vmatmul.mubr.f32.gmra.mxu0 %v1557
        %v1768 = vpop.f32.mrf.mxu0
        %v1769 = vadd.f32 0.0, %v1768
        %v1770 = vpop.f32.mrf.mxu0
        %v1771 = vadd.f32 0.0, %v1770
        %1772 = vmatprep.mubr.f32.mxu0 0.0
        %1773 = vmatmul.mubr.f32.gmra.mxu0 %v1560
        %v1774 = vpop.f32.mrf.mxu0
        %v1775 = vadd.f32 0.0, %v1774
        %v1776 = vpop.f32.mrf.mxu0
        %v1777 = vadd.f32 0.0, %v1776
        %1778 = vmatprep.mubr.f32.mxu0 0.0
        %1779 = vmatmul.mubr.f32.gmra.mxu0 %v1563
        %v1780 = vpop.f32.mrf.mxu0
        %v1781 = vadd.f32 0.0, %v1780
        %v1782 = vpop.f32.mrf.mxu0
        %v1783 = vadd.f32 0.0, %v1782
        %1784 = vmatprep.mubr.f32.mxu0 0.0
        %1785 = vmatmul.mubr.f32.gmra.mxu0 %v1566
        %v1786 = vpop.f32.mrf.mxu0
        %v1787 = vadd.f32 0.0, %v1786
        %v1788 = vpop.f32.mrf.mxu0
        %v1789 = vadd.f32 0.0, %v1788
        %1790 = vmatprep.mubr.f32.mxu0 0.0
        %1791 = vmatmul.mubr.f32.gmra.mxu0 %v1569
        %v1792 = vpop.f32.mrf.mxu0
        %v1793 = vadd.f32 0.0, %v1792
        %v1794 = vpop.f32.mrf.mxu0
        %v1795 = vadd.f32 0.0, %v1794
        %1796 = vdwg.mxu0
        %v1797 = vadd.f32 %v1498, %v1638
        %v1798 = vadd.f32 %v1499, %v1640
        %v1799 = vadd.f32 %v1500, %v1751
        %v1800 = vadd.f32 %v1501, %v1753
        %v1801 = vadd.f32 %v1502, %v1644
        %v1802 = vadd.f32 %v1503, %v1646
        %v1803 = vadd.f32 %v1504, %v1757
        %v1804 = vadd.f32 %v1505, %v1759
        %v1805 = vadd.f32 %v1506, %v1650
        %v1806 = vadd.f32 %v1507, %v1652
        %v1807 = vadd.f32 %v1508, %v1763
        %v1808 = vadd.f32 %v1509, %v1765
        %v1809 = vadd.f32 %v1510, %v1656
        %v1810 = vadd.f32 %v1511, %v1658
        %v1811 = vadd.f32 %v1512, %v1769
        %v1812 = vadd.f32 %v1513, %v1771
        %v1813 = vadd.f32 %v1514, %v1662
        %v1814 = vadd.f32 %v1515, %v1664
        %v1815 = vadd.f32 %v1516, %v1775
        %v1816 = vadd.f32 %v1517, %v1777
        %v1817 = vadd.f32 %v1518, %v1668
        %v1818 = vadd.f32 %v1519, %v1670
        %v1819 = vadd.f32 %v1520, %v1781
        %v1820 = vadd.f32 %v1521, %v1783
        %v1821 = vadd.f32 %v1522, %v1674
        %v1822 = vadd.f32 %v1523, %v1676
        %v1823 = vadd.f32 %v1524, %v1787
        %v1824 = vadd.f32 %v1525, %v1789
        %v1825 = vadd.f32 %v1526, %v1680
        %v1826 = vadd.f32 %v1527, %v1682
        %v1827 = vadd.f32 %v1528, %v1793
        %v1828 = vadd.f32 %v1529, %v1795
        %v1829 = vld [vmem:[%s5] sm:$0xff]
        %v1830 = vld [vmem:[%s5 + $0x8] sm:$0xff]
        %v1831 = vld [vmem:[%s5 + $0x10] sm:$0xff]
        %v1832 = vld [vmem:[%s5 + $0x18] sm:$0xff]
        %v1833 = vld [vmem:[%s5 + $0x20] sm:$0xff]
        %v1834 = vld [vmem:[%s5 + $0x28] sm:$0xff]
        %v1835 = vld [vmem:[%s5 + $0x30] sm:$0xff]
        %v1836 = vld [vmem:[%s5 + $0x38] sm:$0xff]
        %1838 = vset.pattern.permute.xlu0 0
        %1839 = vperm.xlu0 %1838, %v1829
        %v1840 = vpop.permute.xlu0 %1839
        %1843 = vset.pattern.permute.xlu0 0
        %1844 = vperm.xlu0 %1843, %v1830
        %v1845 = vpop.permute.xlu0 %1844
        %1848 = vset.pattern.permute.xlu0 0
        %1849 = vperm.xlu0 %1848, %v1831
        %v1850 = vpop.permute.xlu0 %1849
        %1853 = vset.pattern.permute.xlu0 0
        %1854 = vperm.xlu0 %1853, %v1832
        %v1855 = vpop.permute.xlu0 %1854
        %1858 = vset.pattern.permute.xlu0 0
        %1859 = vperm.xlu0 %1858, %v1833
        %v1860 = vpop.permute.xlu0 %1859
        %1863 = vset.pattern.permute.xlu0 0
        %1864 = vperm.xlu0 %1863, %v1834
        %v1865 = vpop.permute.xlu0 %1864
        %1868 = vset.pattern.permute.xlu0 0
        %1869 = vperm.xlu0 %1868, %v1835
        %v1870 = vpop.permute.xlu0 %1869
        %1873 = vset.pattern.permute.xlu0 0
        %1874 = vperm.xlu0 %1873, %v1836
        %v1875 = vpop.permute.xlu0 %1874
        %v1877 = vadd.f32 %v1797, %v1840
        %v1878 = vadd.f32 %v1798, %v1840
        %v1879 = vadd.f32 %v1799, %v1840
        %v1880 = vadd.f32 %v1800, %v1840
        %v1881 = vadd.f32 %v1801, %v1845
        %v1882 = vadd.f32 %v1802, %v1845
        %v1883 = vadd.f32 %v1803, %v1845
        %v1884 = vadd.f32 %v1804, %v1845
        %v1885 = vadd.f32 %v1805, %v1850
        %v1886 = vadd.f32 %v1806, %v1850
        %v1887 = vadd.f32 %v1807, %v1850
        %v1888 = vadd.f32 %v1808, %v1850
        %v1889 = vadd.f32 %v1809, %v1855
        %v1890 = vadd.f32 %v1810, %v1855
        %v1891 = vadd.f32 %v1811, %v1855
        %v1892 = vadd.f32 %v1812, %v1855
        %v1893 = vadd.f32 %v1813, %v1860
        %v1894 = vadd.f32 %v1814, %v1860
        %v1895 = vadd.f32 %v1815, %v1860
        %v1896 = vadd.f32 %v1816, %v1860
        %v1897 = vadd.f32 %v1817, %v1865
        %v1898 = vadd.f32 %v1818, %v1865
        %v1899 = vadd.f32 %v1819, %v1865
        %v1900 = vadd.f32 %v1820, %v1865
        %v1901 = vadd.f32 %v1821, %v1870
        %v1902 = vadd.f32 %v1822, %v1870
        %v1903 = vadd.f32 %v1823, %v1870
        %v1904 = vadd.f32 %v1824, %v1870
        %v1905 = vadd.f32 %v1825, %v1875
        %v1906 = vadd.f32 %v1826, %v1875
        %v1907 = vadd.f32 %v1827, %v1875
        %v1908 = vadd.f32 %v1828, %v1875
        %v1909 = vmax.f32 %v1877, 0.0
        %v1910 = vmax.f32 %v1878, 0.0
        %v1911 = vmax.f32 %v1879, 0.0
        %v1912 = vmax.f32 %v1880, 0.0
        %v1913 = vmax.f32 %v1881, 0.0
        %v1914 = vmax.f32 %v1882, 0.0
        %v1915 = vmax.f32 %v1883, 0.0
        %v1916 = vmax.f32 %v1884, 0.0
        %v1917 = vmax.f32 %v1885, 0.0
        %v1918 = vmax.f32 %v1886, 0.0
        %v1919 = vmax.f32 %v1887, 0.0
        %v1920 = vmax.f32 %v1888, 0.0
        %v1921 = vmax.f32 %v1889, 0.0
        %v1922 = vmax.f32 %v1890, 0.0
        %v1923 = vmax.f32 %v1891, 0.0
        %v1924 = vmax.f32 %v1892, 0.0
        %v1925 = vmax.f32 %v1893, 0.0
        %v1926 = vmax.f32 %v1894, 0.0
        %v1927 = vmax.f32 %v1895, 0.0
        %v1928 = vmax.f32 %v1896, 0.0
        %v1929 = vmax.f32 %v1897, 0.0
        %v1930 = vmax.f32 %v1898, 0.0
        %v1931 = vmax.f32 %v1899, 0.0
        %v1932 = vmax.f32 %v1900, 0.0
        %v1933 = vmax.f32 %v1901, 0.0
        %v1934 = vmax.f32 %v1902, 0.0
        %v1935 = vmax.f32 %v1903, 0.0
        %v1936 = vmax.f32 %v1904, 0.0
        %v1937 = vmax.f32 %v1905, 0.0
        %v1938 = vmax.f32 %v1906, 0.0
        %v1939 = vmax.f32 %v1907, 0.0
        %v1940 = vmax.f32 %v1908, 0.0
        %v1941 = vld [vmem:[%s6] sm:$0xff]
        %v1942 = vld [vmem:[%s6 + $0x8] sm:$0xff]
        %v1943 = vld [vmem:[%s6 + $0x10] sm:$0xff]
        %v1944 = vld [vmem:[%s6 + $0x18] sm:$0xff]
        %v1945 = vld [vmem:[%s7] sm:$0xff]
        %v1946 = vld [vmem:[%s7 + $0x8] sm:$0xff]
        %v1947 = vld [vmem:[%s7 + $0x10] sm:$0xff]
        %v1948 = vld [vmem:[%s7 + $0x18] sm:$0xff]
        %1950 = vset.pattern.permute.xlu0 0
        %1951 = vperm.xlu0 %1950, %v1945
        %v1952 = vpop.permute.xlu0 %1951
        %1955 = vset.pattern.permute.xlu0 0
        %1956 = vperm.xlu0 %1955, %v1946
        %v1957 = vpop.permute.xlu0 %1956
        %1960 = vset.pattern.permute.xlu0 0
        %1961 = vperm.xlu0 %1960, %v1947
        %v1962 = vpop.permute.xlu0 %1961
        %1965 = vset.pattern.permute.xlu0 0
        %1966 = vperm.xlu0 %1965, %v1948
        %v1967 = vpop.permute.xlu0 %1966
        %v1970 = vsel %vm1247, %v1941, 0
        %v1973 = vsel %vm1247, %v1942, 0
        %v1976 = vsel %vm1247, %v1943, 0
        %v1979 = vsel %vm1247, %v1944, 0
        %1981 = vmatprep.subr.mxu0 0.0
        %1982 = vmatpush1.msra.mxu0 0.0
        %1983 = vmatprep.subr.mxu0 0.0
        %1984 = vmatpush1.msra.mxu0 0.0
        %1985 = vmatprep.subr.mxu0 0.0
        %1986 = vmatpush1.msra.mxu0 0.0
        %1987 = vmatprep.subr.mxu0 0.0
        %1988 = vmatpush1.msra.mxu0 0.0
        %1989 = vmatprep.subr.mxu0 0.0
        %1990 = vmatpush1.msra.mxu0 0.0
        %1991 = vmatprep.subr.mxu0 0.0
        %1992 = vmatpush1.msra.mxu0 0.0
        %1993 = vmatprep.subr.mxu0 0.0
        %1994 = vmatpush1.msra.mxu0 0.0
        %1995 = vmatprep.subr.mxu0 0.0
        %1996 = vmatpush1.msra.mxu0 0.0
        %1997 = vmatprep.subr.mxu0 %v1938
        %1998 = vmatpush1.msra.mxu0 %v1937
        %1999 = vmatprep.subr.mxu0 %v1934
        %2000 = vmatpush1.msra.mxu0 %v1933
        %2001 = vmatprep.subr.mxu0 %v1930
        %2002 = vmatpush1.msra.mxu0 %v1929
        %2003 = vmatprep.subr.mxu0 %v1926
        %2004 = vmatpush1.msra.mxu0 %v1925
        %2005 = vmatprep.subr.mxu0 %v1922
        %2006 = vmatpush1.msra.mxu0 %v1921
        %2007 = vmatprep.subr.mxu0 %v1918
        %2008 = vmatpush1.msra.mxu0 %v1917
        %2009 = vmatprep.subr.mxu0 %v1914
        %2010 = vmatpush1.msra.mxu0 %v1913
        %2011 = vmatprep.subr.mxu0 %v1910
        %2012 = vmatpush1.msra.mxu0 %v1909
        %2013 = vmatprep.subr.mxu0 0.0
        %2014 = vmatpush2.msra.mxu0 0.0
        %2015 = vmatprep.subr.mxu0 0.0
        %2016 = vmatpush2.msra.mxu0 0.0
        %2017 = vmatprep.subr.mxu0 0.0
        %2018 = vmatpush2.msra.mxu0 0.0
        %2019 = vmatprep.subr.mxu0 0.0
        %2020 = vmatpush2.msra.mxu0 0.0
        %2021 = vmatprep.subr.mxu0 0.0
        %2022 = vmatpush2.msra.mxu0 0.0
        %2023 = vmatprep.subr.mxu0 0.0
        %2024 = vmatpush2.msra.mxu0 0.0
        %2025 = vmatprep.subr.mxu0 0.0
        %2026 = vmatpush2.msra.mxu0 0.0
        %2027 = vmatprep.subr.mxu0 0.0
        %2028 = vmatpush2.msra.mxu0 0.0
        %2029 = vmatprep.subr.mxu0 0.0
        %2030 = vmatpush2.msra.mxu0 0.0
        %2031 = vmatprep.subr.mxu0 0.0
        %2032 = vmatpush2.msra.mxu0 0.0
        %2033 = vmatprep.subr.mxu0 0.0
        %2034 = vmatpush2.msra.mxu0 0.0
        %2035 = vmatprep.subr.mxu0 0.0
        %2036 = vmatpush2.msra.mxu0 0.0
        %2037 = vmatprep.subr.mxu0 0.0
        %2038 = vmatpush2.msra.mxu0 0.0
        %2039 = vmatprep.subr.mxu0 0.0
        %2040 = vmatpush2.msra.mxu0 0.0
        %2041 = vmatprep.subr.mxu0 0.0
        %2042 = vmatpush2.msra.mxu0 0.0
        %2043 = vmatprep.subr.mxu0 0.0
        %2044 = vmatpush2.msra.mxu0 0.0
        %2045 = vmatprep.mubr.f32.mxu0 0.0
        %2046 = vmatmul.mubr.f32.gmra.mxu0 %v1970
        %v2047 = vpop.f32.mrf.mxu0
        %v2048 = vadd.f32 %v1952, %v2047
        %v2049 = vpop.f32.mrf.mxu0
        %v2050 = vadd.f32 %v1952, %v2049
        %2051 = vmatprep.mubr.f32.mxu0 0.0
        %2052 = vmatmul.mubr.f32.gmra.mxu0 %v1973
        %v2053 = vpop.f32.mrf.mxu0
        %v2054 = vadd.f32 %v1957, %v2053
        %v2055 = vpop.f32.mrf.mxu0
        %v2056 = vadd.f32 %v1957, %v2055
        %2057 = vmatprep.mubr.f32.mxu0 0.0
        %2058 = vmatmul.mubr.f32.gmra.mxu0 %v1976
        %v2059 = vpop.f32.mrf.mxu0
        %v2060 = vadd.f32 %v1962, %v2059
        %v2061 = vpop.f32.mrf.mxu0
        %v2062 = vadd.f32 %v1962, %v2061
        %2063 = vmatprep.mubr.f32.mxu0 0.0
        %2064 = vmatmul.mubr.f32.gmra.mxu0 %v1979
        %v2065 = vpop.f32.mrf.mxu0
        %v2066 = vadd.f32 %v1967, %v2065
        %v2067 = vpop.f32.mrf.mxu0
        %v2068 = vadd.f32 %v1967, %v2067
        %2069 = vdwg.mxu0
        %2070 = vmatprep.subr.mxu0 0.0
        %2071 = vmatpush1.msra.mxu0 0.0
        %2072 = vmatprep.subr.mxu0 0.0
        %2073 = vmatpush1.msra.mxu0 0.0
        %2074 = vmatprep.subr.mxu0 0.0
        %2075 = vmatpush1.msra.mxu0 0.0
        %2076 = vmatprep.subr.mxu0 0.0
        %2077 = vmatpush1.msra.mxu0 0.0
        %2078 = vmatprep.subr.mxu0 0.0
        %2079 = vmatpush1.msra.mxu0 0.0
        %2080 = vmatprep.subr.mxu0 0.0
        %2081 = vmatpush1.msra.mxu0 0.0
        %2082 = vmatprep.subr.mxu0 0.0
        %2083 = vmatpush1.msra.mxu0 0.0
        %2084 = vmatprep.subr.mxu0 0.0
        %2085 = vmatpush1.msra.mxu0 0.0
        %2086 = vmatprep.subr.mxu0 %v1940
        %2087 = vmatpush1.msra.mxu0 %v1939
        %2088 = vmatprep.subr.mxu0 %v1936
        %2089 = vmatpush1.msra.mxu0 %v1935
        %2090 = vmatprep.subr.mxu0 %v1932
        %2091 = vmatpush1.msra.mxu0 %v1931
        %2092 = vmatprep.subr.mxu0 %v1928
        %2093 = vmatpush1.msra.mxu0 %v1927
        %2094 = vmatprep.subr.mxu0 %v1924
        %2095 = vmatpush1.msra.mxu0 %v1923
        %2096 = vmatprep.subr.mxu0 %v1920
        %2097 = vmatpush1.msra.mxu0 %v1919
        %2098 = vmatprep.subr.mxu0 %v1916
        %2099 = vmatpush1.msra.mxu0 %v1915
        %2100 = vmatprep.subr.mxu0 %v1912
        %2101 = vmatpush1.msra.mxu0 %v1911
        %2102 = vmatprep.subr.mxu0 0.0
        %2103 = vmatpush2.msra.mxu0 0.0
        %2104 = vmatprep.subr.mxu0 0.0
        %2105 = vmatpush2.msra.mxu0 0.0
        %2106 = vmatprep.subr.mxu0 0.0
        %2107 = vmatpush2.msra.mxu0 0.0
        %2108 = vmatprep.subr.mxu0 0.0
        %2109 = vmatpush2.msra.mxu0 0.0
        %2110 = vmatprep.subr.mxu0 0.0
        %2111 = vmatpush2.msra.mxu0 0.0
        %2112 = vmatprep.subr.mxu0 0.0
        %2113 = vmatpush2.msra.mxu0 0.0
        %2114 = vmatprep.subr.mxu0 0.0
        %2115 = vmatpush2.msra.mxu0 0.0
        %2116 = vmatprep.subr.mxu0 0.0
        %2117 = vmatpush2.msra.mxu0 0.0
        %2118 = vmatprep.subr.mxu0 0.0
        %2119 = vmatpush2.msra.mxu0 0.0
        %2120 = vmatprep.subr.mxu0 0.0
        %2121 = vmatpush2.msra.mxu0 0.0
        %2122 = vmatprep.subr.mxu0 0.0
        %2123 = vmatpush2.msra.mxu0 0.0
        %2124 = vmatprep.subr.mxu0 0.0
        %2125 = vmatpush2.msra.mxu0 0.0
        %2126 = vmatprep.subr.mxu0 0.0
        %2127 = vmatpush2.msra.mxu0 0.0
        %2128 = vmatprep.subr.mxu0 0.0
        %2129 = vmatpush2.msra.mxu0 0.0
        %2130 = vmatprep.subr.mxu0 0.0
        %2131 = vmatpush2.msra.mxu0 0.0
        %2132 = vmatprep.subr.mxu0 0.0
        %2133 = vmatpush2.msra.mxu0 0.0
        %2134 = vmatprep.mubr.f32.mxu0 0.0
        %2135 = vmatmul.mubr.f32.gmra.mxu0 %v1970
        %v2136 = vpop.f32.mrf.mxu0
        %v2137 = vadd.f32 %v1952, %v2136
        %v2138 = vpop.f32.mrf.mxu0
        %v2139 = vadd.f32 %v1952, %v2138
        %2140 = vmatprep.mubr.f32.mxu0 0.0
        %2141 = vmatmul.mubr.f32.gmra.mxu0 %v1973
        %v2142 = vpop.f32.mrf.mxu0
        %v2143 = vadd.f32 %v1957, %v2142
        %v2144 = vpop.f32.mrf.mxu0
        %v2145 = vadd.f32 %v1957, %v2144
        %2146 = vmatprep.mubr.f32.mxu0 0.0
        %2147 = vmatmul.mubr.f32.gmra.mxu0 %v1976
        %v2148 = vpop.f32.mrf.mxu0
        %v2149 = vadd.f32 %v1962, %v2148
        %v2150 = vpop.f32.mrf.mxu0
        %v2151 = vadd.f32 %v1962, %v2150
        %2152 = vmatprep.mubr.f32.mxu0 0.0
        %2153 = vmatmul.mubr.f32.gmra.mxu0 %v1979
        %v2154 = vpop.f32.mrf.mxu0
        %v2155 = vadd.f32 %v1967, %v2154
        %v2156 = vpop.f32.mrf.mxu0
        %v2157 = vadd.f32 %v1967, %v2156
        %2158 = vdwg.mxu0
        %v2159 = vmax.f32 %v2048, 0.0
        %v2160 = vmax.f32 %v2050, 0.0
        %v2161 = vmax.f32 %v2137, 0.0
        %v2162 = vmax.f32 %v2139, 0.0
        %v2163 = vmax.f32 %v2054, 0.0
        %v2164 = vmax.f32 %v2056, 0.0
        %v2165 = vmax.f32 %v2143, 0.0
        %v2166 = vmax.f32 %v2145, 0.0
        %v2167 = vmax.f32 %v2060, 0.0
        %v2168 = vmax.f32 %v2062, 0.0
        %v2169 = vmax.f32 %v2149, 0.0
        %v2170 = vmax.f32 %v2151, 0.0
        %v2171 = vmax.f32 %v2066, 0.0
        %v2172 = vmax.f32 %v2068, 0.0
        %v2173 = vmax.f32 %v2155, 0.0
        %v2174 = vmax.f32 %v2157, 0.0
        %2175 = vst [vmem:[%s379] sm:$0xff] %v2159
        %2176 = vst [vmem:[%s379 + $0x8] sm:$0xff] %v2160
        %2177 = vst [vmem:[%s379 + $0x10] sm:$0xff] %v2161
        %2178 = vst [vmem:[%s379 + $0x18] sm:$0xff] %v2162
        %2179 = vst [vmem:[%s379 + $0x20] sm:$0xff] %v2163
        %2180 = vst [vmem:[%s379 + $0x28] sm:$0xff] %v2164
        %2181 = vst [vmem:[%s379 + $0x30] sm:$0xff] %v2165
        %2182 = vst [vmem:[%s379 + $0x38] sm:$0xff] %v2166
        %2183 = vst [vmem:[%s379 + $0x40] sm:$0xff] %v2167
        %2184 = vst [vmem:[%s379 + $0x48] sm:$0xff] %v2168
        %2185 = vst [vmem:[%s379 + $0x50] sm:$0xff] %v2169
        %2186 = vst [vmem:[%s379 + $0x58] sm:$0xff] %v2170
        %2187 = vst [vmem:[%s379 + $0x60] sm:$0xff] %v2171
        %2188 = vst [vmem:[%s379 + $0x68] sm:$0xff] %v2172
        %2189 = vst [vmem:[%s379 + $0x70] sm:$0xff] %v2173
        %2190 = vst [vmem:[%s379 + $0x78] sm:$0xff] %v2174
        %s2191 = sand.u32 %s236, 1
        %s2192 = scalar_lea.sflag [#allocation3], %s2191
        %s2193 = sand.u32 %s236, 1
        %s2194 = smul.addr %s2193, 128
        %s2195 = scalar_lea.vmem [#allocation2], %s2194
        // Predicated region
        $region53: #{tpu_custom_call.1} parent=51 // pred_check
          %p2196 = pneg %p246
        $region54: #{tpu_custom_call.1} parent=51 // pred_check_branch
          %2198 = sbr.rel (%p2196) target = $region56
        $region55: #{tpu_custom_call.1} parent=51 // pred_region
          %s2199 = smul.u32 4, %s27
          %s2201 = ssub.s32 2048, 2048
          %2202 = vsyncadd %s2192, %s2201
          %s2203 = smul.addr %s26, 16
          %s2204 = sadd.s32 %s2199, %s2203
          %s2205 = smul.addr %s2204, 128
          %s2206 = scalar_lea.hbm %s8, %s2205
          %s2207 = sshll.u32 %s2195, 4
          %s2208 = int_to_ptr.vmem [resolvable:$true] %s2207
          %2213 = dma.vmem_to_hbm [thread:$0]  %s2208, 2048, %s2206, %s2192, 512, 512, 32
        $region56: #{tpu_custom_call.1} parent=51 // pred_fallthru
          _
      $region52: #{tpu_custom_call.1} parent=5 // pred_fallthru
        _
      %p2214 = scmp.le.s32.totalorder 2, %s17
      // Predicated region
      $region57: #{tpu_custom_call.1} parent=5 // pred_check
        %p2215 = pneg %p2214
      $region58: #{tpu_custom_call.1} parent=5 // pred_check_branch
        %2217 = sbr.rel (%p2215) target = $region60
      $region59: #{tpu_custom_call.1} parent=5 // pred_region
        %s2218 = ssub.s32 %s17, 2
        // Predicated region
        $region61: #{tpu_custom_call.1} parent=59 // pred_check
          %p2219 = pneg %p252
        $region62: #{tpu_custom_call.1} parent=59 // pred_check_branch
          %2221 = sbr.rel (%p2219) target = $region64
        $region63: #{tpu_custom_call.1} parent=59 // pred_region
          %s2222 = sand.u32 %s237, 1
          %s2223 = scalar_lea.sflag [#allocation3], %s2222
          %s2224 = sand.u32 %s237, 1
          %s2225 = smul.addr %s2224, 128
          %s2226 = scalar_lea.vmem [#allocation2], %s2225
          %2227 = dma.done %s2223, 2048
        $region64: #{tpu_custom_call.1} parent=59 // pred_fallthru
          _
      $region60: #{tpu_custom_call.1} parent=5 // pred_fallthru
        _
    $region6: #{tpu_custom_call.1} parent=1 // loop_footer
      %s21 = sadd.s32 1, %s17
    $region7: #{tpu_custom_call.1} parent=1 // loop_footer_branch
      %16 = sbr.rel target = $region3
    $region8: #{tpu_custom_call.1} parent=1 // loop_exit
      _
    %2228 = vsyncpa [#allocation3], 1
    %s2229 = scalar_lea.sflag [#allocation3], 1
    %2230 = vsyncpa %s2229, 1

</llo_original>
